<compile_context>
chip_gen: v6e
topology: v6e:2x2x1
jax: 0.10.0
libtpu: 0.0.40
codegen_flags: <defaults>
</compile_context>

<pallas_src>
import functools

import jax
import jax.numpy as jnp
from jax.experimental import pallas as pl
from jax.experimental.pallas import tpu as pltpu

# Logical layer sizes of the reference MLP and their 128-lane padded versions.
DIMS = (1, 300, 200, 100, 50, 1)
PAD = (1, 384, 256, 128, 128, 1)

DEFAULT_TILE_B = 256  # batch rows per grid step (multiple of 128)


def _mlp_kernel(x_ref,
                w1_ref, b1_ref,
                w2_ref, b2_ref,
                w3_ref, b3_ref,
                w4_ref, b4_ref,
                w5_ref, b5_ref,
                o_ref):
    """One batch tile of the fused 5-layer MLP."""
    x = x_ref[...]                                        # (TILE_B, 1) f32

    # ---- Layer 1: in_features == 1. A K=1 matmul runs the MXU at 1/128
    # (v5e) or 1/256 (v6e/v7x) utilization, so do it on the VPU instead:
    # (TILE_B,1) * (1,D1) + (1,D1), then ReLU. Padded columns stay exactly 0.
    h = jnp.maximum(x * w1_ref[...] + b1_ref[...], 0.0)   # (TILE_B, D1) f32

    # ---- Layers 2-4: MXU matmuls, bf16 operands, f32 accumulation.
    # Bias add + ReLU stay in the f32 accumulator on the VPU.
    def linear_relu(h, w_ref, b_ref):
        y = jnp.dot(h.astype(jnp.bfloat16), w_ref[...],
                    preferred_element_type=jnp.float32)
        return jnp.maximum(y + b_ref[...], 0.0)

    h = linear_relu(h, w2_ref, b2_ref)                    # (TILE_B, D2)
    h = linear_relu(h, w3_ref, b3_ref)                    # (TILE_B, D3)
    h = linear_relu(h, w4_ref, b4_ref)                    # (TILE_B, D4)

    # ---- Layer 5: out_features == 1. Instead of h @ w5_col (which wastes
    # 127/255 result lanes and forces a masked (TILE_B,1) store), contract the
    # feature axis of h against the w5 row: (1,D4) . (TILE_B,D4) -> (1,TILE_B).
    # The per-row scalar output lands on the lane axis, so the store below is
    # a full-width, unmasked vst (lane-dense output).
    out_row = jax.lax.dot_general(
        w5_ref[...], h.astype(jnp.bfloat16),
        dimension_numbers=(((1,), (1,)), ((), ())),
        preferred_element_type=jnp.float32)               # (1, TILE_B) f32
    o_ref[...] = (out_row + b5_ref[...]).astype(o_ref.dtype)


@functools.partial(jax.jit, static_argnames=("tile_b",))
def mlp_forward(x, packed_params, *, tile_b=DEFAULT_TILE_B):
    """x: (B, 1) float32; packed_params: output of pack_params()."""
    assert tile_b % 128 == 0
    batch = x.shape[0]
    num_tiles = pl.cdiv(batch, tile_b)
    padded_b = num_tiles * tile_b

    # Zero-pad the batch tail; padded rows are sliced away at the end.
    x_pad = jnp.pad(x.astype(jnp.float32), ((0, padded_b - batch), (0, 0)))

    # x streams over the batch grid; every weight/bias has a constant
    # index_map so it is DMA'd into VMEM once and stays resident across steps.
    in_specs = [pl.BlockSpec((tile_b, 1), lambda i: (i, 0))]
    in_specs += [pl.BlockSpec(p.shape, lambda i: (0, 0)) for p in packed_params]

    # Lane-dense output: one (1, TILE_B) row block per grid step.
    out_shape = jax.ShapeDtypeStruct((1, padded_b), jnp.float32)
    out_spec = pl.BlockSpec((1, tile_b), lambda i: (0, i))

    w1, b1, w2, b2, w3, b3, w4, b4, w5, b5 = packed_params
    flops = 2 * padded_b * (w1.shape[1]
                            + w2.shape[0] * w2.shape[1]
                            + w3.shape[0] * w3.shape[1]
                            + w4.shape[0] * w4.shape[1]
                            + w5.shape[1])
    bytes_accessed = (x_pad.size * 4 + padded_b * 4
                      + sum(int(p.size) * p.dtype.itemsize
                            for p in packed_params))
    cost = pl.CostEstimate(flops=flops, transcendentals=0,
                           bytes_accessed=bytes_accessed)

    out = pl.pallas_call(
        _mlp_kernel,
        grid=(num_tiles,),
        in_specs=in_specs,
        out_specs=out_spec,
        out_shape=out_shape,
        compiler_params=pltpu.CompilerParams(
            # batch tiles are independent -> v7x shards them across both TCs;
            # harmless on v5e/v6e.
            dimension_semantics=("parallel",)),
        cost_estimate=cost,
    )(x_pad, *packed_params)

    return out[0, :batch].reshape(batch, 1)


def init_raw_params(key):
    """Unpadded f32 params matching nn.Linear's U(-1/sqrt(in), 1/sqrt(in)).

    Weights are (in, out) (pre-transposed vs. PyTorch's (out, in)), biases (out,).
    """
    raw = []
    for i in range(len(DIMS) - 1):
        fan_in, fan_out = DIMS[i], DIMS[i + 1]
        key, kw, kb = jax.random.split(key, 3)
        bound = 1.0 / (fan_in ** 0.5)
        w = jax.random.uniform(kw, (fan_in, fan_out), jnp.float32,
                               minval=-bound, maxval=bound)
        b = jax.random.uniform(kb, (fan_out,), jnp.float32,
                               minval=-bound, maxval=bound)
        raw.append((w, b))
    return raw


def pack_params(raw_params):
    """Pad hidden dims to multiples of 128 and cast MXU weights to bf16.

    Zero padding of both weights and biases + ReLU guarantees padded
    activation columns are exactly 0, so results equal the unpadded model.
    """
    (w1, b1), (w2, b2), (w3, b3), (w4, b4), (w5, b5) = raw_params
    d1, d2, d3, d4 = PAD[1], PAD[2], PAD[3], PAD[4]

    def pad2(a, rows, cols):
        return jnp.pad(a, ((0, rows - a.shape[0]), (0, cols - a.shape[1])))

    w1p = pad2(w1, 1, d1)                                   # (1, 384) f32 (VPU)
    b1p = pad2(b1[None, :], 1, d1)                          # (1, 384) f32
    w2p = pad2(w2, d1, d2).astype(jnp.bfloat16)             # (384, 256) bf16
    b2p = pad2(b2[None, :], 1, d2)                          # (1, 256) f32
    w3p = pad2(w3, d2, d3).astype(jnp.bfloat16)             # (256, 128) bf16
    b3p = pad2(b3[None, :], 1, d3)                          # (1, 128) f32
    w4p = pad2(w4, d3, d4).astype(jnp.bfloat16)             # (128, 128) bf16
    b4p = pad2(b4[None, :], 1, d4)                          # (1, 128) f32
    w5p = pad2(w5.T, 1, d4).astype(jnp.bfloat16)            # (1, 128) bf16 row
    b5p = b5.reshape(1, 1)                                  # (1, 1) f32
    return (w1p, b1p, w2p, b2p, w3p, b3p, w4p, b4p, w5p, b5p)


def mlp_reference(x, raw_params):
    """Pure-JAX reference with the same bf16-in / f32-accumulate numerics."""
    (w1, b1), (w2, b2), (w3, b3), (w4, b4), (w5, b5) = raw_params
    h = jnp.maximum(x * w1 + b1, 0.0)        # K=1 layer, exact in f32

    def lin_relu(h, w, b):
        y = jnp.dot(h.astype(jnp.bfloat16), w.astype(jnp.bfloat16),
                    preferred_element_type=jnp.float32) + b
        return jnp.maximum(y, 0.0)

    h = lin_relu(h, w2, b2)
    h = lin_relu(h, w3, b3)
    h = lin_relu(h, w4, b4)
    return jnp.dot(h.astype(jnp.bfloat16), w5.astype(jnp.bfloat16),
                   preferred_element_type=jnp.float32) + b5


if __name__ == "__main__":
    key = jax.random.PRNGKey(0)
    key, kx = jax.random.split(key)

    batch = 8
    x = jax.random.normal(kx, (batch, 1), jnp.float32)

    raw = init_raw_params(key)
    packed = pack_params(raw)

    out = mlp_forward(x, packed)
    out = jax.block_until_ready(out)

    ref = mlp_reference(x, raw)
    assert out.shape == (batch, 1), out.shape
    max_err = jnp.max(jnp.abs(out - ref))
    assert jnp.allclose(out, ref, atol=1e-2, rtol=1e-2), (
        f"max abs err {max_err}")

    print("KERNEL_OK")
</pallas_src>

<mosaic_0001>
module attributes {stable_mosaic.version = 11 : i64} {
  func.func @_mlp_kernel(%arg0: i32, %arg1: memref<256x1xf32, #tpu.memory_space<vmem>>, %arg2: memref<1x384xf32, #tpu.memory_space<vmem>>, %arg3: memref<1x384xf32, #tpu.memory_space<vmem>>, %arg4: memref<384x256xbf16, #tpu.memory_space<vmem>>, %arg5: memref<1x256xf32, #tpu.memory_space<vmem>>, %arg6: memref<256x128xbf16, #tpu.memory_space<vmem>>, %arg7: memref<1x128xf32, #tpu.memory_space<vmem>>, %arg8: memref<128x128xbf16, #tpu.memory_space<vmem>>, %arg9: memref<1x128xf32, #tpu.memory_space<vmem>>, %arg10: memref<1x128xbf16, #tpu.memory_space<vmem>>, %arg11: memref<1x1xf32, #tpu.memory_space<vmem>>, %arg12: memref<1x256xf32, #tpu.memory_space<vmem>>) attributes {dimension_semantics = [#tpu.dimension_semantics<parallel>], iteration_bounds = array<i64: 1>, scalar_prefetch = 0 : i64, scratch_operands = 0 : i64, tpu.core_type = #tpu.core_type<tc>, window_params = [{transform_indices = @transform_0, window_bounds = array<i64: 256, 1>}, {pipeline_mode = #tpu.pipeline_mode<synchronous>, transform_indices = @transform_1, window_bounds = array<i64: 1, 384>}, {pipeline_mode = #tpu.pipeline_mode<synchronous>, transform_indices = @transform_2, window_bounds = array<i64: 1, 384>}, {pipeline_mode = #tpu.pipeline_mode<synchronous>, transform_indices = @transform_3, window_bounds = array<i64: 384, 256>}, {pipeline_mode = #tpu.pipeline_mode<synchronous>, transform_indices = @transform_4, window_bounds = array<i64: 1, 256>}, {pipeline_mode = #tpu.pipeline_mode<synchronous>, transform_indices = @transform_5, window_bounds = array<i64: 256, 128>}, {pipeline_mode = #tpu.pipeline_mode<synchronous>, transform_indices = @transform_6, window_bounds = array<i64: 1, 128>}, {pipeline_mode = #tpu.pipeline_mode<synchronous>, transform_indices = @transform_7, window_bounds = array<i64: 128, 128>}, {pipeline_mode = #tpu.pipeline_mode<synchronous>, transform_indices = @transform_8, window_bounds = array<i64: 1, 128>}, {pipeline_mode = #tpu.pipeline_mode<synchronous>, transform_indices = @transform_9, window_bounds = array<i64: 1, 128>}, {pipeline_mode = #tpu.pipeline_mode<synchronous>, transform_indices = @transform_10, window_bounds = array<i64: 1, 1>}, {transform_indices = @transform_11, window_bounds = array<i64: 1, 256>}]} {
    %c0 = arith.constant 0 : index
    %c0_0 = arith.constant 0 : index
    %0 = vector.load %arg1[%c0, %c0_0] : memref<256x1xf32, #tpu.memory_space<vmem>>, vector<256x1xf32>
    %c0_1 = arith.constant 0 : index
    %c0_2 = arith.constant 0 : index
    %1 = vector.load %arg2[%c0_1, %c0_2] : memref<1x384xf32, #tpu.memory_space<vmem>>, vector<1x384xf32>
    %2 = vector.broadcast %0 : vector<256x1xf32> to vector<256x384xf32>
    %3 = vector.broadcast %1 : vector<1x384xf32> to vector<256x384xf32>
    %4 = arith.mulf %2, %3 : vector<256x384xf32>
    %c0_3 = arith.constant 0 : index
    %c0_4 = arith.constant 0 : index
    %5 = vector.load %arg3[%c0_3, %c0_4] : memref<1x384xf32, #tpu.memory_space<vmem>>, vector<1x384xf32>
    %6 = vector.broadcast %5 : vector<1x384xf32> to vector<256x384xf32>
    %7 = arith.addf %4, %6 : vector<256x384xf32>
    %cst = arith.constant 0.000000e+00 : f32
    %8 = vector.broadcast %cst : f32 to vector<256x384xf32>
    %9 = arith.maximumf %7, %8 : vector<256x384xf32>
    %10 = arith.truncf %9 : vector<256x384xf32> to vector<256x384xbf16>
    %c0_5 = arith.constant 0 : index
    %c0_6 = arith.constant 0 : index
    %11 = vector.load %arg4[%c0_5, %c0_6] : memref<384x256xbf16, #tpu.memory_space<vmem>>, vector<384x256xbf16>
    %cst_7 = arith.constant dense<0.000000e+00> : vector<256x256xf32>
    %12 = tpu.matmul %10, %11, %cst_7 {dimension_numbers = #tpu.dot_dimension_numbers<[1], [0], [0], [1], [0, 0, 1, 1], [], []>} : vector<256x384xbf16>, vector<384x256xbf16>, vector<256x256xf32> -> vector<256x256xf32>
    %c0_8 = arith.constant 0 : index
    %c0_9 = arith.constant 0 : index
    %13 = vector.load %arg5[%c0_8, %c0_9] : memref<1x256xf32, #tpu.memory_space<vmem>>, vector<1x256xf32>
    %14 = vector.broadcast %13 : vector<1x256xf32> to vector<256x256xf32>
    %15 = arith.addf %12, %14 : vector<256x256xf32>
    %cst_10 = arith.constant 0.000000e+00 : f32
    %16 = vector.broadcast %cst_10 : f32 to vector<256x256xf32>
    %17 = arith.maximumf %15, %16 : vector<256x256xf32>
    %18 = arith.truncf %17 : vector<256x256xf32> to vector<256x256xbf16>
    %c0_11 = arith.constant 0 : index
    %c0_12 = arith.constant 0 : index
    %19 = vector.load %arg6[%c0_11, %c0_12] : memref<256x128xbf16, #tpu.memory_space<vmem>>, vector<256x128xbf16>
    %cst_13 = arith.constant dense<0.000000e+00> : vector<256x128xf32>
    %20 = tpu.matmul %18, %19, %cst_13 {dimension_numbers = #tpu.dot_dimension_numbers<[1], [0], [0], [1], [0, 0, 1, 1], [], []>} : vector<256x256xbf16>, vector<256x128xbf16>, vector<256x128xf32> -> vector<256x128xf32>
    %c0_14 = arith.constant 0 : index
    %c0_15 = arith.constant 0 : index
    %21 = vector.load %arg7[%c0_14, %c0_15] : memref<1x128xf32, #tpu.memory_space<vmem>>, vector<1x128xf32>
    %22 = vector.broadcast %21 : vector<1x128xf32> to vector<256x128xf32>
    %23 = arith.addf %20, %22 : vector<256x128xf32>
    %cst_16 = arith.constant 0.000000e+00 : f32
    %24 = vector.broadcast %cst_16 : f32 to vector<256x128xf32>
    %25 = arith.maximumf %23, %24 : vector<256x128xf32>
    %26 = arith.truncf %25 : vector<256x128xf32> to vector<256x128xbf16>
    %c0_17 = arith.constant 0 : index
    %c0_18 = arith.constant 0 : index
    %27 = vector.load %arg8[%c0_17, %c0_18] : memref<128x128xbf16, #tpu.memory_space<vmem>>, vector<128x128xbf16>
    %cst_19 = arith.constant dense<0.000000e+00> : vector<256x128xf32>
    %28 = tpu.matmul %26, %27, %cst_19 {dimension_numbers = #tpu.dot_dimension_numbers<[1], [0], [0], [1], [0, 0, 1, 1], [], []>} : vector<256x128xbf16>, vector<128x128xbf16>, vector<256x128xf32> -> vector<256x128xf32>
    %c0_20 = arith.constant 0 : index
    %c0_21 = arith.constant 0 : index
    %29 = vector.load %arg9[%c0_20, %c0_21] : memref<1x128xf32, #tpu.memory_space<vmem>>, vector<1x128xf32>
    %30 = vector.broadcast %29 : vector<1x128xf32> to vector<256x128xf32>
    %31 = arith.addf %28, %30 : vector<256x128xf32>
    %cst_22 = arith.constant 0.000000e+00 : f32
    %32 = vector.broadcast %cst_22 : f32 to vector<256x128xf32>
    %33 = arith.maximumf %31, %32 : vector<256x128xf32>
    %c0_23 = arith.constant 0 : index
    %c0_24 = arith.constant 0 : index
    %34 = vector.load %arg10[%c0_23, %c0_24] : memref<1x128xbf16, #tpu.memory_space<vmem>>, vector<1x128xbf16>
    %35 = arith.truncf %33 : vector<256x128xf32> to vector<256x128xbf16>
    %cst_25 = arith.constant dense<0.000000e+00> : vector<1x256xf32>
    %36 = tpu.matmul %34, %35, %cst_25 {dimension_numbers = #tpu.dot_dimension_numbers<[1], [1], [0], [0], [0, 0, 1, 0], [], []>} : vector<1x128xbf16>, vector<256x128xbf16>, vector<1x256xf32> -> vector<1x256xf32>
    %c0_26 = arith.constant 0 : index
    %c0_27 = arith.constant 0 : index
    %37 = vector.load %arg11[%c0_26, %c0_27] : memref<1x1xf32, #tpu.memory_space<vmem>>, vector<1x1xf32>
    %38 = vector.broadcast %37 : vector<1x1xf32> to vector<1x256xf32>
    %39 = arith.addf %36, %38 : vector<1x256xf32>
    %c0_28 = arith.constant 0 : index
    %c0_29 = arith.constant 0 : index
    %40 = vector.load %arg12[%c0_28, %c0_29] : memref<1x256xf32, #tpu.memory_space<vmem>>, vector<1x256xf32>
    tpu.vector_store %arg12[%c0_28, %c0_29], %39 {strides = array<i32>} : memref<1x256xf32, #tpu.memory_space<vmem>>, vector<1x256xf32>,
    return
  }
  func.func @transform_0(%arg0: i32) -> (i32, i32) {
    %c0_i32 = arith.constant 0 : i32
    %c0_i32_0 = arith.constant 0 : i32
    return %arg0, %c0_i32 : i32, i32
  }
  func.func @transform_1(%arg0: i32) -> (i32, i32) {
    %c0_i32 = arith.constant 0 : i32
    %c0_i32_0 = arith.constant 0 : i32
    %c0_i32_1 = arith.constant 0 : i32
    return %c0_i32, %c0_i32_0 : i32, i32
  }
  func.func @transform_2(%arg0: i32) -> (i32, i32) {
    %c0_i32 = arith.constant 0 : i32
    %c0_i32_0 = arith.constant 0 : i32
    %c0_i32_1 = arith.constant 0 : i32
    return %c0_i32, %c0_i32_0 : i32, i32
  }
  func.func @transform_3(%arg0: i32) -> (i32, i32) {
    %c0_i32 = arith.constant 0 : i32
    %c0_i32_0 = arith.constant 0 : i32
    %c0_i32_1 = arith.constant 0 : i32
    return %c0_i32, %c0_i32_0 : i32, i32
  }
  func.func @transform_4(%arg0: i32) -> (i32, i32) {
    %c0_i32 = arith.constant 0 : i32
    %c0_i32_0 = arith.constant 0 : i32
    %c0_i32_1 = arith.constant 0 : i32
    return %c0_i32, %c0_i32_0 : i32, i32
  }
  func.func @transform_5(%arg0: i32) -> (i32, i32) {
    %c0_i32 = arith.constant 0 : i32
    %c0_i32_0 = arith.constant 0 : i32
    %c0_i32_1 = arith.constant 0 : i32
    return %c0_i32, %c0_i32_0 : i32, i32
  }
  func.func @transform_6(%arg0: i32) -> (i32, i32) {
    %c0_i32 = arith.constant 0 : i32
    %c0_i32_0 = arith.constant 0 : i32
    %c0_i32_1 = arith.constant 0 : i32
    return %c0_i32, %c0_i32_0 : i32, i32
  }
  func.func @transform_7(%arg0: i32) -> (i32, i32) {
    %c0_i32 = arith.constant 0 : i32
    %c0_i32_0 = arith.constant 0 : i32
    %c0_i32_1 = arith.constant 0 : i32
    return %c0_i32, %c0_i32_0 : i32, i32
  }
  func.func @transform_8(%arg0: i32) -> (i32, i32) {
    %c0_i32 = arith.constant 0 : i32
    %c0_i32_0 = arith.constant 0 : i32
    %c0_i32_1 = arith.constant 0 : i32
    return %c0_i32, %c0_i32_0 : i32, i32
  }
  func.func @transform_9(%arg0: i32) -> (i32, i32) {
    %c0_i32 = arith.constant 0 : i32
    %c0_i32_0 = arith.constant 0 : i32
    %c0_i32_1 = arith.constant 0 : i32
    return %c0_i32, %c0_i32_0 : i32, i32
  }
  func.func @transform_10(%arg0: i32) -> (i32, i32) {
    %c0_i32 = arith.constant 0 : i32
    %c0_i32_0 = arith.constant 0 : i32
    %c0_i32_1 = arith.constant 0 : i32
    return %c0_i32, %c0_i32_0 : i32, i32
  }
  func.func @transform_11(%arg0: i32) -> (i32, i32) {
    %c0_i32 = arith.constant 0 : i32
    %c0_i32_0 = arith.constant 0 : i32
    return %c0_i32, %arg0 : i32, i32
  }
}

</mosaic_0001>

<llo_original>
// kernel: mlp_forward.1
$region0: #{mlp_forward.1}
  #allocation0 [shape = 'u32[]', space=smem, size = 0x4, offset = 0x4, fixed_abs, tag = 'smem constant byte address 0x4 - core index']
  #allocation1 [shape = 'u32[144,128]{1,0:T(1,128)}', space=vmem, size = 0x12000, scoped, tag = 'internal scratch']
  #allocation2 [shape = 'f32[1,1]{1,0:T(1,128)S(1)}', space=vmem, size = 0x200, scoped, tag = 'scoped memory for mlp_forward.1']
  %s0 = inlined_call_operand.vmem [shape: f32[256,1], index: 0, kind: input, shape index: {}]
  %s1 = inlined_call_operand.vmem [shape: f32[1,384], index: 1, kind: input, shape index: {}]
  %s2 = inlined_call_operand.vmem [shape: f32[1,384], index: 2, kind: input, shape index: {}]
  %s3 = inlined_call_operand.hbm [shape: bf16[384,256], index: 3, kind: input, shape index: {}]
  %s4 = inlined_call_operand.vmem [shape: f32[1,256], index: 4, kind: input, shape index: {}]
  %s5 = inlined_call_operand.vmem [shape: bf16[256,128], index: 5, kind: input, shape index: {}]
  %s6 = inlined_call_operand.vmem [shape: f32[1,128], index: 6, kind: input, shape index: {}]
  %s7 = inlined_call_operand.vmem [shape: bf16[128,128], index: 7, kind: input, shape index: {}]
  %s8 = inlined_call_operand.vmem [shape: f32[1,128], index: 8, kind: input, shape index: {}]
  %s9 = inlined_call_operand.vmem [shape: bf16[1,128], index: 9, kind: input, shape index: {}]
  %s10 = inlined_call_operand.<no memory space> [shape: f32[1,1], index: 10, kind: input, shape index: {}]
  %s11 = inlined_call_operand.vmem [shape: f32[1,256], index: 11, kind: output, shape index: {}]
  %s12 = sld [smem:[#allocation0]]
  $region58: #{mlp_forward.1} parent=0
    _
  %s14 = ssub.s32 1, %s12
  %s15 = scalar_select 0, %s14, %s12
  %v16 = vstv %s10
  %17 = vst [vmem:[#allocation2] sm:$0x1] %v16
  $region1: #{mlp_forward.1} parent=0
    #allocation3 [shape = 'u8[196608]{0}', space=vmem, size = 0x30000, scoped, tag = 'input window, operand 3, single buffered']
    #allocation4 [shape = 's32[1]{0}', space=sflag, size = 0x4, scoped, tag = 'scoped memory for mlp_forward.1']
    %18 = vsyncpa [#allocation4], 0
    // Predicated region
    $region2: #{mlp_forward.1} parent=1 // pred_check
      _
    $region3: #{mlp_forward.1} parent=1 // pred_check_branch
      %20 = sbr.rel (0) target = $region5
    $region4: #{mlp_forward.1} parent=1 // pred_region
      _
    $region5: #{mlp_forward.1} parent=1 // pred_fallthru
      _
    // Predicated region
    $region6: #{mlp_forward.1} parent=1 // pred_check
      _
    $region7: #{mlp_forward.1} parent=1 // pred_check_branch
      %22 = sbr.rel (0) target = $region9
    $region8: #{mlp_forward.1} parent=1 // pred_region
      _
    $region9: #{mlp_forward.1} parent=1 // pred_fallthru
      _
    // Predicated region
    $region10: #{mlp_forward.1} parent=1 // pred_check
      _
    $region11: #{mlp_forward.1} parent=1 // pred_check_branch
      %24 = sbr.rel (0) target = $region13
    $region12: #{mlp_forward.1} parent=1 // pred_region
      _
    $region13: #{mlp_forward.1} parent=1 // pred_fallthru
      _
    // Predicated region
    $region14: #{mlp_forward.1} parent=1 // pred_check
      _
    $region15: #{mlp_forward.1} parent=1 // pred_check_branch
      %26 = sbr.rel (0) target = $region17
    $region16: #{mlp_forward.1} parent=1 // pred_region
      %s28 = ssub.s32 6144, 6144
      %29 = vsyncadd [#allocation4], %s28
      %s30 = sshll.u32 [#allocation3], 4
      %s31 = int_to_ptr.vmem [resolvable:$true] %s30
      %36 = dma.hbm_to_vmem [thread:$0]  %s3, 6144, %s31, [#allocation4], 128, 128, 8
    $region17: #{mlp_forward.1} parent=1 // pred_fallthru
      _
    // Predicated region
    $region18: #{mlp_forward.1} parent=1 // pred_check
      _
    $region19: #{mlp_forward.1} parent=1 // pred_check_branch
      %38 = sbr.rel (0) target = $region21
    $region20: #{mlp_forward.1} parent=1 // pred_region
      _
    $region21: #{mlp_forward.1} parent=1 // pred_fallthru
      _
    // Predicated region
    $region22: #{mlp_forward.1} parent=1 // pred_check
      _
    $region23: #{mlp_forward.1} parent=1 // pred_check_branch
      %40 = sbr.rel (0) target = $region25
    $region24: #{mlp_forward.1} parent=1 // pred_region
      _
    $region25: #{mlp_forward.1} parent=1 // pred_fallthru
      _
    // Predicated region
    $region26: #{mlp_forward.1} parent=1 // pred_check
      _
    $region27: #{mlp_forward.1} parent=1 // pred_check_branch
      %42 = sbr.rel (0) target = $region29
    $region28: #{mlp_forward.1} parent=1 // pred_region
      _
    $region29: #{mlp_forward.1} parent=1 // pred_fallthru
      _
    // Predicated region
    $region30: #{mlp_forward.1} parent=1 // pred_check
      _
    $region31: #{mlp_forward.1} parent=1 // pred_check_branch
      %44 = sbr.rel (0) target = $region33
    $region32: #{mlp_forward.1} parent=1 // pred_region
      _
    $region33: #{mlp_forward.1} parent=1 // pred_fallthru
      _
    // Predicated region
    $region34: #{mlp_forward.1} parent=1 // pred_check
      _
    $region35: #{mlp_forward.1} parent=1 // pred_check_branch
      %46 = sbr.rel (0) target = $region37
    $region36: #{mlp_forward.1} parent=1 // pred_region
      _
    $region37: #{mlp_forward.1} parent=1 // pred_fallthru
      _
    // Predicated region
    $region38: #{mlp_forward.1} parent=1 // pred_check
      _
    $region39: #{mlp_forward.1} parent=1 // pred_check_branch
      %48 = sbr.rel (0) target = $region41
    $region40: #{mlp_forward.1} parent=1 // pred_region
      _
    $region41: #{mlp_forward.1} parent=1 // pred_fallthru
      _
    // Predicated region
    $region42: #{mlp_forward.1} parent=1 // pred_check
      _
    $region43: #{mlp_forward.1} parent=1 // pred_check_branch
      %50 = sbr.rel (0) target = $region45
    $region44: #{mlp_forward.1} parent=1 // pred_region
      _
    $region45: #{mlp_forward.1} parent=1 // pred_fallthru
      _
    // Predicated region
    $region46: #{mlp_forward.1} parent=1 // pred_check
      _
    $region47: #{mlp_forward.1} parent=1 // pred_check_branch
      %52 = sbr.rel (0) target = $region49
    $region48: #{mlp_forward.1} parent=1 // pred_region
      %53 = dma.done [#allocation4], 6144
    $region49: #{mlp_forward.1} parent=1 // pred_fallthru
      _
    %v55 = vld [vmem:[%s0] sm:$0xff]
    %v56 = vld [vmem:[%s0 + $0x8] sm:$0xff]
    %v57 = vld [vmem:[%s0 + $0x10] sm:$0xff]
    %v58 = vld [vmem:[%s0 + $0x18] sm:$0xff]
    %v59 = vld [vmem:[%s0 + $0x20] sm:$0xff]
    %v60 = vld [vmem:[%s0 + $0x28] sm:$0xff]
    %v61 = vld [vmem:[%s0 + $0x30] sm:$0xff]
    %v62 = vld [vmem:[%s0 + $0x38] sm:$0xff]
    %v63 = vld [vmem:[%s0 + $0x40] sm:$0xff]
    %v64 = vld [vmem:[%s0 + $0x48] sm:$0xff]
    %v65 = vld [vmem:[%s0 + $0x50] sm:$0xff]
    %v66 = vld [vmem:[%s0 + $0x58] sm:$0xff]
    %v67 = vld [vmem:[%s0 + $0x60] sm:$0xff]
    %v68 = vld [vmem:[%s0 + $0x68] sm:$0xff]
    %v69 = vld [vmem:[%s0 + $0x70] sm:$0xff]
    %v70 = vld [vmem:[%s0 + $0x78] sm:$0xff]
    %v71 = vld [vmem:[%s0 + $0x80] sm:$0xff]
    %v72 = vld [vmem:[%s0 + $0x88] sm:$0xff]
    %v73 = vld [vmem:[%s0 + $0x90] sm:$0xff]
    %v74 = vld [vmem:[%s0 + $0x98] sm:$0xff]
    %v75 = vld [vmem:[%s0 + $0xa0] sm:$0xff]
    %v76 = vld [vmem:[%s0 + $0xa8] sm:$0xff]
    %v77 = vld [vmem:[%s0 + $0xb0] sm:$0xff]
    %v78 = vld [vmem:[%s0 + $0xb8] sm:$0xff]
    %v79 = vld [vmem:[%s0 + $0xc0] sm:$0xff]
    %v80 = vld [vmem:[%s0 + $0xc8] sm:$0xff]
    %v81 = vld [vmem:[%s0 + $0xd0] sm:$0xff]
    %v82 = vld [vmem:[%s0 + $0xd8] sm:$0xff]
    %v83 = vld [vmem:[%s0 + $0xe0] sm:$0xff]
    %v84 = vld [vmem:[%s0 + $0xe8] sm:$0xff]
    %v85 = vld [vmem:[%s0 + $0xf0] sm:$0xff]
    %v86 = vld [vmem:[%s0 + $0xf8] sm:$0xff]
    %v87 = vld [vmem:[%s1] sm:$0x7]
    %89 = vset.pattern.permute.xlu0 0
    %90 = vperm.xlu0 %89, %v55
    %v91 = vpop.permute.xlu0 %90
    %94 = vset.pattern.permute.xlu0 0
    %95 = vperm.xlu0 %94, %v56
    %v96 = vpop.permute.xlu0 %95
    %99 = vset.pattern.permute.xlu0 0
    %100 = vperm.xlu0 %99, %v57
    %v101 = vpop.permute.xlu0 %100
    %104 = vset.pattern.permute.xlu0 0
    %105 = vperm.xlu0 %104, %v58
    %v106 = vpop.permute.xlu0 %105
    %109 = vset.pattern.permute.xlu0 0
    %110 = vperm.xlu0 %109, %v59
    %v111 = vpop.permute.xlu0 %110
    %114 = vset.pattern.permute.xlu0 0
    %115 = vperm.xlu0 %114, %v60
    %v116 = vpop.permute.xlu0 %115
    %119 = vset.pattern.permute.xlu0 0
    %120 = vperm.xlu0 %119, %v61
    %v121 = vpop.permute.xlu0 %120
    %124 = vset.pattern.permute.xlu0 0
    %125 = vperm.xlu0 %124, %v62
    %v126 = vpop.permute.xlu0 %125
    %129 = vset.pattern.permute.xlu0 0
    %130 = vperm.xlu0 %129, %v63
    %v131 = vpop.permute.xlu0 %130
    %134 = vset.pattern.permute.xlu0 0
    %135 = vperm.xlu0 %134, %v64
    %v136 = vpop.permute.xlu0 %135
    %139 = vset.pattern.permute.xlu0 0
    %140 = vperm.xlu0 %139, %v65
    %v141 = vpop.permute.xlu0 %140
    %144 = vset.pattern.permute.xlu0 0
    %145 = vperm.xlu0 %144, %v66
    %v146 = vpop.permute.xlu0 %145
    %149 = vset.pattern.permute.xlu0 0
    %150 = vperm.xlu0 %149, %v67
    %v151 = vpop.permute.xlu0 %150
    %154 = vset.pattern.permute.xlu0 0
    %155 = vperm.xlu0 %154, %v68
    %v156 = vpop.permute.xlu0 %155
    %159 = vset.pattern.permute.xlu0 0
    %160 = vperm.xlu0 %159, %v69
    %v161 = vpop.permute.xlu0 %160
    %164 = vset.pattern.permute.xlu0 0
    %165 = vperm.xlu0 %164, %v70
    %v166 = vpop.permute.xlu0 %165
    %169 = vset.pattern.permute.xlu0 0
    %170 = vperm.xlu0 %169, %v71
    %v171 = vpop.permute.xlu0 %170
    %174 = vset.pattern.permute.xlu0 0
    %175 = vperm.xlu0 %174, %v72
    %v176 = vpop.permute.xlu0 %175
    %179 = vset.pattern.permute.xlu0 0
    %180 = vperm.xlu0 %179, %v73
    %v181 = vpop.permute.xlu0 %180
    %184 = vset.pattern.permute.xlu0 0
    %185 = vperm.xlu0 %184, %v74
    %v186 = vpop.permute.xlu0 %185
    %189 = vset.pattern.permute.xlu0 0
    %190 = vperm.xlu0 %189, %v75
    %v191 = vpop.permute.xlu0 %190
    %194 = vset.pattern.permute.xlu0 0
    %195 = vperm.xlu0 %194, %v76
    %v196 = vpop.permute.xlu0 %195
    %199 = vset.pattern.permute.xlu0 0
    %200 = vperm.xlu0 %199, %v77
    %v201 = vpop.permute.xlu0 %200
    %204 = vset.pattern.permute.xlu0 0
    %205 = vperm.xlu0 %204, %v78
    %v206 = vpop.permute.xlu0 %205
    %209 = vset.pattern.permute.xlu0 0
    %210 = vperm.xlu0 %209, %v79
    %v211 = vpop.permute.xlu0 %210
    %214 = vset.pattern.permute.xlu0 0
    %215 = vperm.xlu0 %214, %v80
    %v216 = vpop.permute.xlu0 %215
    %219 = vset.pattern.permute.xlu0 0
    %220 = vperm.xlu0 %219, %v81
    %v221 = vpop.permute.xlu0 %220
    %224 = vset.pattern.permute.xlu0 0
    %225 = vperm.xlu0 %224, %v82
    %v226 = vpop.permute.xlu0 %225
    %229 = vset.pattern.permute.xlu0 0
    %230 = vperm.xlu0 %229, %v83
    %v231 = vpop.permute.xlu0 %230
    %234 = vset.pattern.permute.xlu0 0
    %235 = vperm.xlu0 %234, %v84
    %v236 = vpop.permute.xlu0 %235
    %239 = vset.pattern.permute.xlu0 0
    %240 = vperm.xlu0 %239, %v85
    %v241 = vpop.permute.xlu0 %240
    %244 = vset.pattern.permute.xlu0 0
    %245 = vperm.xlu0 %244, %v86
    %v246 = vpop.permute.xlu0 %245
    %v249 = vlaneseq
    %v250 = vshrl.u32 %v249, 7
    %v251 = vsub.s32 0, %v250
    %v252 = vrot.slane %v87, %v251
    %v253 = vlaneseq
    %v254 = vshrl.u32 %v253, 7
    %v255 = vsub.s32 1, %v254
    %v256 = vrot.slane %v87, %v255
    %v257 = vlaneseq
    %v258 = vshrl.u32 %v257, 7
    %v259 = vsub.s32 2, %v258
    %v260 = vrot.slane %v87, %v259
    %v264 = vmul.f32 %v91, %v252
    %v265 = vmul.f32 %v91, %v256
    %v266 = vmul.f32 %v91, %v260
    %v267 = vmul.f32 %v96, %v252
    %v268 = vmul.f32 %v96, %v256
    %v269 = vmul.f32 %v96, %v260
    %v270 = vmul.f32 %v101, %v252
    %v271 = vmul.f32 %v101, %v256
    %v272 = vmul.f32 %v101, %v260
    %v273 = vmul.f32 %v106, %v252
    %v274 = vmul.f32 %v106, %v256
    %v275 = vmul.f32 %v106, %v260
    %v276 = vmul.f32 %v111, %v252
    %v277 = vmul.f32 %v111, %v256
    %v278 = vmul.f32 %v111, %v260
    %v279 = vmul.f32 %v116, %v252
    %v280 = vmul.f32 %v116, %v256
    %v281 = vmul.f32 %v116, %v260
    %v282 = vmul.f32 %v121, %v252
    %v283 = vmul.f32 %v121, %v256
    %v284 = vmul.f32 %v121, %v260
    %v285 = vmul.f32 %v126, %v252
    %v286 = vmul.f32 %v126, %v256
    %v287 = vmul.f32 %v126, %v260
    %v288 = vmul.f32 %v131, %v252
    %v289 = vmul.f32 %v131, %v256
    %v290 = vmul.f32 %v131, %v260
    %v291 = vmul.f32 %v136, %v252
    %v292 = vmul.f32 %v136, %v256
    %v293 = vmul.f32 %v136, %v260
    %v294 = vmul.f32 %v141, %v252
    %v295 = vmul.f32 %v141, %v256
    %v296 = vmul.f32 %v141, %v260
    %v297 = vmul.f32 %v146, %v252
    %v298 = vmul.f32 %v146, %v256
    %v299 = vmul.f32 %v146, %v260
    %v300 = vmul.f32 %v151, %v252
    %v301 = vmul.f32 %v151, %v256
    %v302 = vmul.f32 %v151, %v260
    %v303 = vmul.f32 %v156, %v252
    %v304 = vmul.f32 %v156, %v256
    %v305 = vmul.f32 %v156, %v260
    %v306 = vmul.f32 %v161, %v252
    %v307 = vmul.f32 %v161, %v256
    %v308 = vmul.f32 %v161, %v260
    %v309 = vmul.f32 %v166, %v252
    %v310 = vmul.f32 %v166, %v256
    %v311 = vmul.f32 %v166, %v260
    %v312 = vmul.f32 %v171, %v252
    %v313 = vmul.f32 %v171, %v256
    %v314 = vmul.f32 %v171, %v260
    %v315 = vmul.f32 %v176, %v252
    %v316 = vmul.f32 %v176, %v256
    %v317 = vmul.f32 %v176, %v260
    %v318 = vmul.f32 %v181, %v252
    %v319 = vmul.f32 %v181, %v256
    %v320 = vmul.f32 %v181, %v260
    %v321 = vmul.f32 %v186, %v252
    %v322 = vmul.f32 %v186, %v256
    %v323 = vmul.f32 %v186, %v260
    %v324 = vmul.f32 %v191, %v252
    %v325 = vmul.f32 %v191, %v256
    %v326 = vmul.f32 %v191, %v260
    %v327 = vmul.f32 %v196, %v252
    %v328 = vmul.f32 %v196, %v256
    %v329 = vmul.f32 %v196, %v260
    %v330 = vmul.f32 %v201, %v252
    %v331 = vmul.f32 %v201, %v256
    %v332 = vmul.f32 %v201, %v260
    %v333 = vmul.f32 %v206, %v252
    %v334 = vmul.f32 %v206, %v256
    %v335 = vmul.f32 %v206, %v260
    %v336 = vmul.f32 %v211, %v252
    %v337 = vmul.f32 %v211, %v256
    %v338 = vmul.f32 %v211, %v260
    %v339 = vmul.f32 %v216, %v252
    %v340 = vmul.f32 %v216, %v256
    %v341 = vmul.f32 %v216, %v260
    %v342 = vmul.f32 %v221, %v252
    %v343 = vmul.f32 %v221, %v256
    %v344 = vmul.f32 %v221, %v260
    %v345 = vmul.f32 %v226, %v252
    %v346 = vmul.f32 %v226, %v256
    %v347 = vmul.f32 %v226, %v260
    %v348 = vmul.f32 %v231, %v252
    %v349 = vmul.f32 %v231, %v256
    %v350 = vmul.f32 %v231, %v260
    %v351 = vmul.f32 %v236, %v252
    %v352 = vmul.f32 %v236, %v256
    %v353 = vmul.f32 %v236, %v260
    %v354 = vmul.f32 %v241, %v252
    %v355 = vmul.f32 %v241, %v256
    %v356 = vmul.f32 %v241, %v260
    %v357 = vmul.f32 %v246, %v252
    %v358 = vmul.f32 %v246, %v256
    %v359 = vmul.f32 %v246, %v260
    %v360 = vld [vmem:[%s2] sm:$0x7]
    %v362 = vlaneseq
    %v363 = vshrl.u32 %v362, 7
    %v364 = vsub.s32 0, %v363
    %v365 = vrot.slane %v360, %v364
    %v366 = vlaneseq
    %v367 = vshrl.u32 %v366, 7
    %v368 = vsub.s32 1, %v367
    %v369 = vrot.slane %v360, %v368
    %v370 = vlaneseq
    %v371 = vshrl.u32 %v370, 7
    %v372 = vsub.s32 2, %v371
    %v373 = vrot.slane %v360, %v372
    %v377 = vadd.f32 %v264, %v365
    %v378 = vadd.f32 %v265, %v369
    %v379 = vadd.f32 %v266, %v373
    %v380 = vadd.f32 %v267, %v365
    %v381 = vadd.f32 %v268, %v369
    %v382 = vadd.f32 %v269, %v373
    %v383 = vadd.f32 %v270, %v365
    %v384 = vadd.f32 %v271, %v369
    %v385 = vadd.f32 %v272, %v373
    %v386 = vadd.f32 %v273, %v365
    %v387 = vadd.f32 %v274, %v369
    %v388 = vadd.f32 %v275, %v373
    %v389 = vadd.f32 %v276, %v365
    %v390 = vadd.f32 %v277, %v369
    %v391 = vadd.f32 %v278, %v373
    %v392 = vadd.f32 %v279, %v365
    %v393 = vadd.f32 %v280, %v369
    %v394 = vadd.f32 %v281, %v373
    %v395 = vadd.f32 %v282, %v365
    %v396 = vadd.f32 %v283, %v369
    %v397 = vadd.f32 %v284, %v373
    %v398 = vadd.f32 %v285, %v365
    %v399 = vadd.f32 %v286, %v369
    %v400 = vadd.f32 %v287, %v373
    %v401 = vadd.f32 %v288, %v365
    %v402 = vadd.f32 %v289, %v369
    %v403 = vadd.f32 %v290, %v373
    %v404 = vadd.f32 %v291, %v365
    %v405 = vadd.f32 %v292, %v369
    %v406 = vadd.f32 %v293, %v373
    %v407 = vadd.f32 %v294, %v365
    %v408 = vadd.f32 %v295, %v369
    %v409 = vadd.f32 %v296, %v373
    %v410 = vadd.f32 %v297, %v365
    %v411 = vadd.f32 %v298, %v369
    %v412 = vadd.f32 %v299, %v373
    %v413 = vadd.f32 %v300, %v365
    %v414 = vadd.f32 %v301, %v369
    %v415 = vadd.f32 %v302, %v373
    %v416 = vadd.f32 %v303, %v365
    %v417 = vadd.f32 %v304, %v369
    %v418 = vadd.f32 %v305, %v373
    %v419 = vadd.f32 %v306, %v365
    %v420 = vadd.f32 %v307, %v369
    %v421 = vadd.f32 %v308, %v373
    %v422 = vadd.f32 %v309, %v365
    %v423 = vadd.f32 %v310, %v369
    %v424 = vadd.f32 %v311, %v373
    %v425 = vadd.f32 %v312, %v365
    %v426 = vadd.f32 %v313, %v369
    %v427 = vadd.f32 %v314, %v373
    %v428 = vadd.f32 %v315, %v365
    %v429 = vadd.f32 %v316, %v369
    %v430 = vadd.f32 %v317, %v373
    %v431 = vadd.f32 %v318, %v365
    %v432 = vadd.f32 %v319, %v369
    %v433 = vadd.f32 %v320, %v373
    %v434 = vadd.f32 %v321, %v365
    %v435 = vadd.f32 %v322, %v369
    %v436 = vadd.f32 %v323, %v373
    %v437 = vadd.f32 %v324, %v365
    %v438 = vadd.f32 %v325, %v369
    %v439 = vadd.f32 %v326, %v373
    %v440 = vadd.f32 %v327, %v365
    %v441 = vadd.f32 %v328, %v369
    %v442 = vadd.f32 %v329, %v373
    %v443 = vadd.f32 %v330, %v365
    %v444 = vadd.f32 %v331, %v369
    %v445 = vadd.f32 %v332, %v373
    %v446 = vadd.f32 %v333, %v365
    %v447 = vadd.f32 %v334, %v369
    %v448 = vadd.f32 %v335, %v373
    %v449 = vadd.f32 %v336, %v365
    %v450 = vadd.f32 %v337, %v369
    %v451 = vadd.f32 %v338, %v373
    %v452 = vadd.f32 %v339, %v365
    %v453 = vadd.f32 %v340, %v369
    %v454 = vadd.f32 %v341, %v373
    %v455 = vadd.f32 %v342, %v365
    %v456 = vadd.f32 %v343, %v369
    %v457 = vadd.f32 %v344, %v373
    %v458 = vadd.f32 %v345, %v365
    %v459 = vadd.f32 %v346, %v369
    %v460 = vadd.f32 %v347, %v373
    %v461 = vadd.f32 %v348, %v365
    %v462 = vadd.f32 %v349, %v369
    %v463 = vadd.f32 %v350, %v373
    %v464 = vadd.f32 %v351, %v365
    %v465 = vadd.f32 %v352, %v369
    %v466 = vadd.f32 %v353, %v373
    %v467 = vadd.f32 %v354, %v365
    %v468 = vadd.f32 %v355, %v369
    %v469 = vadd.f32 %v356, %v373
    %v470 = vadd.f32 %v357, %v365
    %v471 = vadd.f32 %v358, %v369
    %v472 = vadd.f32 %v359, %v373
    %v473 = vmax.f32 %v377, 0.0
    %v474 = vmax.f32 %v378, 0.0
    %v475 = vmax.f32 %v379, 0.0
    %v476 = vmax.f32 %v380, 0.0
    %v477 = vmax.f32 %v381, 0.0
    %v478 = vmax.f32 %v382, 0.0
    %v479 = vmax.f32 %v383, 0.0
    %v480 = vmax.f32 %v384, 0.0
    %v481 = vmax.f32 %v385, 0.0
    %v482 = vmax.f32 %v386, 0.0
    %v483 = vmax.f32 %v387, 0.0
    %v484 = vmax.f32 %v388, 0.0
    %v485 = vmax.f32 %v389, 0.0
    %v486 = vmax.f32 %v390, 0.0
    %v487 = vmax.f32 %v391, 0.0
    %v488 = vmax.f32 %v392, 0.0
    %v489 = vmax.f32 %v393, 0.0
    %v490 = vmax.f32 %v394, 0.0
    %v491 = vmax.f32 %v395, 0.0
    %v492 = vmax.f32 %v396, 0.0
    %v493 = vmax.f32 %v397, 0.0
    %v494 = vmax.f32 %v398, 0.0
    %v495 = vmax.f32 %v399, 0.0
    %v496 = vmax.f32 %v400, 0.0
    %v497 = vmax.f32 %v401, 0.0
    %v498 = vmax.f32 %v402, 0.0
    %v499 = vmax.f32 %v403, 0.0
    %v500 = vmax.f32 %v404, 0.0
    %v501 = vmax.f32 %v405, 0.0
    %v502 = vmax.f32 %v406, 0.0
    %v503 = vmax.f32 %v407, 0.0
    %v504 = vmax.f32 %v408, 0.0
    %v505 = vmax.f32 %v409, 0.0
    %v506 = vmax.f32 %v410, 0.0
    %v507 = vmax.f32 %v411, 0.0
    %v508 = vmax.f32 %v412, 0.0
    %v509 = vmax.f32 %v413, 0.0
    %v510 = vmax.f32 %v414, 0.0
    %v511 = vmax.f32 %v415, 0.0
    %v512 = vmax.f32 %v416, 0.0
    %v513 = vmax.f32 %v417, 0.0
    %v514 = vmax.f32 %v418, 0.0
    %v515 = vmax.f32 %v419, 0.0
    %v516 = vmax.f32 %v420, 0.0
    %v517 = vmax.f32 %v421, 0.0
    %v518 = vmax.f32 %v422, 0.0
    %v519 = vmax.f32 %v423, 0.0
    %v520 = vmax.f32 %v424, 0.0
    %v521 = vmax.f32 %v425, 0.0
    %v522 = vmax.f32 %v426, 0.0
    %v523 = vmax.f32 %v427, 0.0
    %v524 = vmax.f32 %v428, 0.0
    %v525 = vmax.f32 %v429, 0.0
    %v526 = vmax.f32 %v430, 0.0
    %v527 = vmax.f32 %v431, 0.0
    %v528 = vmax.f32 %v432, 0.0
    %v529 = vmax.f32 %v433, 0.0
    %v530 = vmax.f32 %v434, 0.0
    %v531 = vmax.f32 %v435, 0.0
    %v532 = vmax.f32 %v436, 0.0
    %v533 = vmax.f32 %v437, 0.0
    %v534 = vmax.f32 %v438, 0.0
    %v535 = vmax.f32 %v439, 0.0
    %v536 = vmax.f32 %v440, 0.0
    %v537 = vmax.f32 %v441, 0.0
    %v538 = vmax.f32 %v442, 0.0
    %v539 = vmax.f32 %v443, 0.0
    %v540 = vmax.f32 %v444, 0.0
    %v541 = vmax.f32 %v445, 0.0
    %v542 = vmax.f32 %v446, 0.0
    %v543 = vmax.f32 %v447, 0.0
    %v544 = vmax.f32 %v448, 0.0
    %v545 = vmax.f32 %v449, 0.0
    %v546 = vmax.f32 %v450, 0.0
    %v547 = vmax.f32 %v451, 0.0
    %v548 = vmax.f32 %v452, 0.0
    %v549 = vmax.f32 %v453, 0.0
    %v550 = vmax.f32 %v454, 0.0
    %v551 = vmax.f32 %v455, 0.0
    %v552 = vmax.f32 %v456, 0.0
    %v553 = vmax.f32 %v457, 0.0
    %v554 = vmax.f32 %v458, 0.0
    %v555 = vmax.f32 %v459, 0.0
    %v556 = vmax.f32 %v460, 0.0
    %v557 = vmax.f32 %v461, 0.0
    %v558 = vmax.f32 %v462, 0.0
    %v559 = vmax.f32 %v463, 0.0
    %v560 = vmax.f32 %v464, 0.0
    %v561 = vmax.f32 %v465, 0.0
    %v562 = vmax.f32 %v466, 0.0
    %v563 = vmax.f32 %v467, 0.0
    %v564 = vmax.f32 %v468, 0.0
    %v565 = vmax.f32 %v469, 0.0
    %v566 = vmax.f32 %v470, 0.0
    %v567 = vmax.f32 %v471, 0.0
    %v568 = vmax.f32 %v472, 0.0
    %v569 = vpack.c.bf16 %v476, %v473
    %v570 = vpack.c.bf16 %v477, %v474
    %v571 = vpack.c.bf16 %v478, %v475
    %v572 = vpack.c.bf16 %v482, %v479
    %v573 = vpack.c.bf16 %v483, %v480
    %v574 = vpack.c.bf16 %v484, %v481
    %v575 = vpack.c.bf16 %v488, %v485
    %v576 = vpack.c.bf16 %v489, %v486
    %v577 = vpack.c.bf16 %v490, %v487
    %v578 = vpack.c.bf16 %v494, %v491
    %v579 = vpack.c.bf16 %v495, %v492
    %v580 = vpack.c.bf16 %v496, %v493
    %v581 = vpack.c.bf16 %v500, %v497
    %v582 = vpack.c.bf16 %v501, %v498
    %v583 = vpack.c.bf16 %v502, %v499
    %v584 = vpack.c.bf16 %v506, %v503
    %v585 = vpack.c.bf16 %v507, %v504
    %v586 = vpack.c.bf16 %v508, %v505
    %v587 = vpack.c.bf16 %v512, %v509
    %v588 = vpack.c.bf16 %v513, %v510
    %v589 = vpack.c.bf16 %v514, %v511
    %v590 = vpack.c.bf16 %v518, %v515
    %v591 = vpack.c.bf16 %v519, %v516
    %v592 = vpack.c.bf16 %v520, %v517
    %v593 = vpack.c.bf16 %v524, %v521
    %v594 = vpack.c.bf16 %v525, %v522
    %v595 = vpack.c.bf16 %v526, %v523
    %v596 = vpack.c.bf16 %v530, %v527
    %v597 = vpack.c.bf16 %v531, %v528
    %v598 = vpack.c.bf16 %v532, %v529
    %v599 = vpack.c.bf16 %v536, %v533
    %v600 = vpack.c.bf16 %v537, %v534
    %v601 = vpack.c.bf16 %v538, %v535
    %v602 = vpack.c.bf16 %v542, %v539
    %v603 = vpack.c.bf16 %v543, %v540
    %v604 = vpack.c.bf16 %v544, %v541
    %v605 = vpack.c.bf16 %v548, %v545
    %v606 = vpack.c.bf16 %v549, %v546
    %v607 = vpack.c.bf16 %v550, %v547
    %v608 = vpack.c.bf16 %v554, %v551
    %v609 = vpack.c.bf16 %v555, %v552
    %v610 = vpack.c.bf16 %v556, %v553
    %v611 = vpack.c.bf16 %v560, %v557
    %v612 = vpack.c.bf16 %v561, %v558
    %v613 = vpack.c.bf16 %v562, %v559
    %v614 = vpack.c.bf16 %v566, %v563
    %v615 = vpack.c.bf16 %v567, %v564
    %v616 = vpack.c.bf16 %v568, %v565
    %v617 = vld [vmem:[#allocation3] sm:$0xff]
    %v618 = vld [vmem:[#allocation3 + $0x8] sm:$0xff]
    %v619 = vld [vmem:[#allocation3 + $0x10] sm:$0xff]
    %v620 = vld [vmem:[#allocation3 + $0x18] sm:$0xff]
    %v621 = vld [vmem:[#allocation3 + $0x20] sm:$0xff]
    %v622 = vld [vmem:[#allocation3 + $0x28] sm:$0xff]
    %v623 = vld [vmem:[#allocation3 + $0x30] sm:$0xff]
    %v624 = vld [vmem:[#allocation3 + $0x38] sm:$0xff]
    %v625 = vld [vmem:[#allocation3 + $0x40] sm:$0xff]
    %v626 = vld [vmem:[#allocation3 + $0x48] sm:$0xff]
    %v627 = vld [vmem:[#allocation3 + $0x50] sm:$0xff]
    %v628 = vld [vmem:[#allocation3 + $0x58] sm:$0xff]
    %v629 = vld [vmem:[#allocation3 + $0x60] sm:$0xff]
    %v630 = vld [vmem:[#allocation3 + $0x68] sm:$0xff]
    %v631 = vld [vmem:[#allocation3 + $0x70] sm:$0xff]
    %v632 = vld [vmem:[#allocation3 + $0x78] sm:$0xff]
    %v633 = vld [vmem:[#allocation3 + $0x80] sm:$0xff]
    %v634 = vld [vmem:[#allocation3 + $0x88] sm:$0xff]
    %v635 = vld [vmem:[#allocation3 + $0x90] sm:$0xff]
    %v636 = vld [vmem:[#allocation3 + $0x98] sm:$0xff]
    %v637 = vld [vmem:[#allocation3 + $0xa0] sm:$0xff]
    %v638 = vld [vmem:[#allocation3 + $0xa8] sm:$0xff]
    %v639 = vld [vmem:[#allocation3 + $0xb0] sm:$0xff]
    %v640 = vld [vmem:[#allocation3 + $0xb8] sm:$0xff]
    %v641 = vld [vmem:[#allocation3 + $0xc0] sm:$0xff]
    %v642 = vld [vmem:[#allocation3 + $0xc8] sm:$0xff]
    %v643 = vld [vmem:[#allocation3 + $0xd0] sm:$0xff]
    %v644 = vld [vmem:[#allocation3 + $0xd8] sm:$0xff]
    %v645 = vld [vmem:[#allocation3 + $0xe0] sm:$0xff]
    %v646 = vld [vmem:[#allocation3 + $0xe8] sm:$0xff]
    %v647 = vld [vmem:[#allocation3 + $0xf0] sm:$0xff]
    %v648 = vld [vmem:[#allocation3 + $0xf8] sm:$0xff]
    %v649 = vld [vmem:[#allocation3 + $0x100] sm:$0xff]
    %v650 = vld [vmem:[#allocation3 + $0x108] sm:$0xff]
    %v651 = vld [vmem:[#allocation3 + $0x110] sm:$0xff]
    %v652 = vld [vmem:[#allocation3 + $0x118] sm:$0xff]
    %v653 = vld [vmem:[#allocation3 + $0x120] sm:$0xff]
    %v654 = vld [vmem:[#allocation3 + $0x128] sm:$0xff]
    %v655 = vld [vmem:[#allocation3 + $0x130] sm:$0xff]
    %v656 = vld [vmem:[#allocation3 + $0x138] sm:$0xff]
    %v657 = vld [vmem:[#allocation3 + $0x140] sm:$0xff]
    %v658 = vld [vmem:[#allocation3 + $0x148] sm:$0xff]
    %v659 = vld [vmem:[#allocation3 + $0x150] sm:$0xff]
    %v660 = vld [vmem:[#allocation3 + $0x158] sm:$0xff]
    %v661 = vld [vmem:[#allocation3 + $0x160] sm:$0xff]
    %v662 = vld [vmem:[#allocation3 + $0x168] sm:$0xff]
    %v663 = vld [vmem:[#allocation3 + $0x170] sm:$0xff]
    %v664 = vld [vmem:[#allocation3 + $0x178] sm:$0xff]
    %v665 = vld [vmem:[%s4] sm:$0x3]
    %v667 = vlaneseq
    %v668 = vshrl.u32 %v667, 7
    %v669 = vsub.s32 0, %v668
    %v670 = vrot.slane %v665, %v669
    %v671 = vlaneseq
    %v672 = vshrl.u32 %v671, 7
    %v673 = vsub.s32 1, %v672
    %v674 = vrot.slane %v665, %v673
    %v725 = vunpack.c.l.b16 %v617
    %v726 = vunpack.c.h.b16 %v617
    %v727 = vunpack.c.l.b16 %v618
    %v728 = vunpack.c.h.b16 %v618
    %v729 = vunpack.c.l.b16 %v619
    %v730 = vunpack.c.h.b16 %v619
    %v731 = vunpack.c.l.b16 %v620
    %v732 = vunpack.c.h.b16 %v620
    %v733 = vunpack.c.l.b16 %v621
    %v734 = vunpack.c.h.b16 %v621
    %v735 = vunpack.c.l.b16 %v622
    %v736 = vunpack.c.h.b16 %v622
    %v737 = vunpack.c.l.b16 %v623
    %v738 = vunpack.c.h.b16 %v623
    %v739 = vunpack.c.l.b16 %v624
    %v740 = vunpack.c.h.b16 %v624
    %v741 = vunpack.c.l.b16 %v625
    %v742 = vunpack.c.h.b16 %v625
    %v743 = vunpack.c.l.b16 %v626
    %v744 = vunpack.c.h.b16 %v626
    %v745 = vunpack.c.l.b16 %v627
    %v746 = vunpack.c.h.b16 %v627
    %v747 = vunpack.c.l.b16 %v628
    %v748 = vunpack.c.h.b16 %v628
    %v749 = vunpack.c.l.b16 %v629
    %v750 = vunpack.c.h.b16 %v629
    %v751 = vunpack.c.l.b16 %v630
    %v752 = vunpack.c.h.b16 %v630
    %v753 = vunpack.c.l.b16 %v631
    %v754 = vunpack.c.h.b16 %v631
    %v755 = vunpack.c.l.b16 %v632
    %v756 = vunpack.c.h.b16 %v632
    %v757 = vunpack.c.l.b16 %v633
    %v758 = vunpack.c.h.b16 %v633
    %v759 = vunpack.c.l.b16 %v634
    %v760 = vunpack.c.h.b16 %v634
    %v761 = vunpack.c.l.b16 %v635
    %v762 = vunpack.c.h.b16 %v635
    %v763 = vunpack.c.l.b16 %v636
    %v764 = vunpack.c.h.b16 %v636
    %v765 = vunpack.c.l.b16 %v637
    %v766 = vunpack.c.h.b16 %v637
    %v767 = vunpack.c.l.b16 %v638
    %v768 = vunpack.c.h.b16 %v638
    %v769 = vunpack.c.l.b16 %v639
    %v770 = vunpack.c.h.b16 %v639
    %v771 = vunpack.c.l.b16 %v640
    %v772 = vunpack.c.h.b16 %v640
    %v773 = vunpack.c.l.b16 %v641
    %v774 = vunpack.c.h.b16 %v641
    %v775 = vunpack.c.l.b16 %v642
    %v776 = vunpack.c.h.b16 %v642
    %v777 = vunpack.c.l.b16 %v643
    %v778 = vunpack.c.h.b16 %v643
    %v779 = vunpack.c.l.b16 %v644
    %v780 = vunpack.c.h.b16 %v644
    %v781 = vunpack.c.l.b16 %v645
    %v782 = vunpack.c.h.b16 %v645
    %v783 = vunpack.c.l.b16 %v646
    %v784 = vunpack.c.h.b16 %v646
    %v785 = vunpack.c.l.b16 %v647
    %v786 = vunpack.c.h.b16 %v647
    %v787 = vunpack.c.l.b16 %v648
    %v788 = vunpack.c.h.b16 %v648
    %v789 = vunpack.c.l.b16 %v649
    %v790 = vunpack.c.h.b16 %v649
    %v791 = vunpack.c.l.b16 %v650
    %v792 = vunpack.c.h.b16 %v650
    %v793 = vunpack.c.l.b16 %v651
    %v794 = vunpack.c.h.b16 %v651
    %v795 = vunpack.c.l.b16 %v652
    %v796 = vunpack.c.h.b16 %v652
    %v797 = vunpack.c.l.b16 %v653
    %v798 = vunpack.c.h.b16 %v653
    %v799 = vunpack.c.l.b16 %v654
    %v800 = vunpack.c.h.b16 %v654
    %v801 = vunpack.c.l.b16 %v655
    %v802 = vunpack.c.h.b16 %v655
    %v803 = vunpack.c.l.b16 %v656
    %v804 = vunpack.c.h.b16 %v656
    %v805 = vunpack.c.l.b16 %v657
    %v806 = vunpack.c.h.b16 %v657
    %v807 = vunpack.c.l.b16 %v658
    %v808 = vunpack.c.h.b16 %v658
    %v809 = vunpack.c.l.b16 %v659
    %v810 = vunpack.c.h.b16 %v659
    %v811 = vunpack.c.l.b16 %v660
    %v812 = vunpack.c.h.b16 %v660
    %v813 = vunpack.c.l.b16 %v661
    %v814 = vunpack.c.h.b16 %v661
    %v815 = vunpack.c.l.b16 %v662
    %v816 = vunpack.c.h.b16 %v662
    %v817 = vunpack.c.l.b16 %v663
    %v818 = vunpack.c.h.b16 %v663
    %v819 = vunpack.c.l.b16 %v664
    %v820 = vunpack.c.h.b16 %v664
    %v821 = vpack.c.b16 %v727, %v725
    %v822 = vpack.c.b16 %v728, %v726
    %v823 = vpack.c.b16 %v731, %v729
    %v824 = vpack.c.b16 %v732, %v730
    %v825 = vpack.c.b16 %v735, %v733
    %v826 = vpack.c.b16 %v736, %v734
    %v827 = vpack.c.b16 %v739, %v737
    %v828 = vpack.c.b16 %v740, %v738
    %v829 = vpack.c.b16 %v743, %v741
    %v830 = vpack.c.b16 %v744, %v742
    %v831 = vpack.c.b16 %v747, %v745
    %v832 = vpack.c.b16 %v748, %v746
    %v833 = vpack.c.b16 %v751, %v749
    %v834 = vpack.c.b16 %v752, %v750
    %v835 = vpack.c.b16 %v755, %v753
    %v836 = vpack.c.b16 %v756, %v754
    %v837 = vpack.c.b16 %v759, %v757
    %v838 = vpack.c.b16 %v760, %v758
    %v839 = vpack.c.b16 %v763, %v761
    %v840 = vpack.c.b16 %v764, %v762
    %v841 = vpack.c.b16 %v767, %v765
    %v842 = vpack.c.b16 %v768, %v766
    %v843 = vpack.c.b16 %v771, %v769
    %v844 = vpack.c.b16 %v772, %v770
    %v845 = vpack.c.b16 %v775, %v773
    %v846 = vpack.c.b16 %v776, %v774
    %v847 = vpack.c.b16 %v779, %v777
    %v848 = vpack.c.b16 %v780, %v778
    %v849 = vpack.c.b16 %v783, %v781
    %v850 = vpack.c.b16 %v784, %v782
    %v851 = vpack.c.b16 %v787, %v785
    %v852 = vpack.c.b16 %v788, %v786
    %v853 = vpack.c.b16 %v791, %v789
    %v854 = vpack.c.b16 %v792, %v790
    %v855 = vpack.c.b16 %v795, %v793
    %v856 = vpack.c.b16 %v796, %v794
    %v857 = vpack.c.b16 %v799, %v797
    %v858 = vpack.c.b16 %v800, %v798
    %v859 = vpack.c.b16 %v803, %v801
    %v860 = vpack.c.b16 %v804, %v802
    %v861 = vpack.c.b16 %v807, %v805
    %v862 = vpack.c.b16 %v808, %v806
    %v863 = vpack.c.b16 %v811, %v809
    %v864 = vpack.c.b16 %v812, %v810
    %v865 = vpack.c.b16 %v815, %v813
    %v866 = vpack.c.b16 %v816, %v814
    %v867 = vpack.c.b16 %v819, %v817
    %v868 = vpack.c.b16 %v820, %v818
    %917 = vmatprep.subr.bf16.mxu0 %v836
    %918 = vmatpush1.bf16.msra.mxu0 %v835
    %919 = vmatprep.subr.bf16.mxu0 %v834
    %920 = vmatpush1.bf16.msra.mxu0 %v833
    %921 = vmatprep.subr.bf16.mxu0 %v832
    %922 = vmatpush1.bf16.msra.mxu0 %v831
    %923 = vmatprep.subr.bf16.mxu0 %v830
    %924 = vmatpush1.bf16.msra.mxu0 %v829
    %925 = vmatprep.subr.bf16.mxu0 %v828
    %926 = vmatpush1.bf16.msra.mxu0 %v827
    %927 = vmatprep.subr.bf16.mxu0 %v826
    %928 = vmatpush1.bf16.msra.mxu0 %v825
    %929 = vmatprep.subr.bf16.mxu0 %v824
    %930 = vmatpush1.bf16.msra.mxu0 %v823
    %931 = vmatprep.subr.bf16.mxu0 %v822
    %932 = vmatpush1.bf16.msra.mxu0 %v821
    %933 = vmatprep.subr.bf16.mxu0 %v852
    %934 = vmatpush2.bf16.msra.mxu0 %v851
    %935 = vmatprep.subr.bf16.mxu0 %v850
    %936 = vmatpush2.bf16.msra.mxu0 %v849
    %937 = vmatprep.subr.bf16.mxu0 %v848
    %938 = vmatpush2.bf16.msra.mxu0 %v847
    %939 = vmatprep.subr.bf16.mxu0 %v846
    %940 = vmatpush2.bf16.msra.mxu0 %v845
    %941 = vmatprep.subr.bf16.mxu0 %v844
    %942 = vmatpush2.bf16.msra.mxu0 %v843
    %943 = vmatprep.subr.bf16.mxu0 %v842
    %944 = vmatpush2.bf16.msra.mxu0 %v841
    %945 = vmatprep.subr.bf16.mxu0 %v840
    %946 = vmatpush2.bf16.msra.mxu0 %v839
    %947 = vmatprep.subr.bf16.mxu0 %v838
    %948 = vmatpush2.bf16.msra.mxu0 %v837
    %949 = vmatprep.mubr.bf16.mxu0 %v570
    %950 = vmatmul.mubr.bf16.gmra.mxu0 %v569
    %v951 = vpop.f32.mrf.mxu0
    %v952 = vadd.f32 %v670, %v951
    %v953 = vpop.f32.mrf.mxu0
    %v954 = vadd.f32 %v674, %v953
    %v955 = vpop.f32.mrf.mxu0
    %v956 = vadd.f32 %v670, %v955
    %v957 = vpop.f32.mrf.mxu0
    %v958 = vadd.f32 %v674, %v957
    %959 = vmatprep.mubr.bf16.mxu0 %v573
    %960 = vmatmul.mubr.bf16.gmra.mxu0 %v572
    %v961 = vpop.f32.mrf.mxu0
    %v962 = vadd.f32 %v670, %v961
    %v963 = vpop.f32.mrf.mxu0
    %v964 = vadd.f32 %v674, %v963
    %v965 = vpop.f32.mrf.mxu0
    %v966 = vadd.f32 %v670, %v965
    %v967 = vpop.f32.mrf.mxu0
    %v968 = vadd.f32 %v674, %v967
    %969 = vmatprep.mubr.bf16.mxu0 %v576
    %970 = vmatmul.mubr.bf16.gmra.mxu0 %v575
    %v971 = vpop.f32.mrf.mxu0
    %v972 = vadd.f32 %v670, %v971
    %v973 = vpop.f32.mrf.mxu0
    %v974 = vadd.f32 %v674, %v973
    %v975 = vpop.f32.mrf.mxu0
    %v976 = vadd.f32 %v670, %v975
    %v977 = vpop.f32.mrf.mxu0
    %v978 = vadd.f32 %v674, %v977
    %979 = vmatprep.mubr.bf16.mxu0 %v579
    %980 = vmatmul.mubr.bf16.gmra.mxu0 %v578
    %v981 = vpop.f32.mrf.mxu0
    %v982 = vadd.f32 %v670, %v981
    %v983 = vpop.f32.mrf.mxu0
    %v984 = vadd.f32 %v674, %v983
    %v985 = vpop.f32.mrf.mxu0
    %v986 = vadd.f32 %v670, %v985
    %v987 = vpop.f32.mrf.mxu0
    %v988 = vadd.f32 %v674, %v987
    %989 = vmatprep.mubr.bf16.mxu0 %v582
    %990 = vmatmul.mubr.bf16.gmra.mxu0 %v581
    %v991 = vpop.f32.mrf.mxu0
    %v992 = vadd.f32 %v670, %v991
    %v993 = vpop.f32.mrf.mxu0
    %v994 = vadd.f32 %v674, %v993
    %v995 = vpop.f32.mrf.mxu0
    %v996 = vadd.f32 %v670, %v995
    %v997 = vpop.f32.mrf.mxu0
    %v998 = vadd.f32 %v674, %v997
    %999 = vmatprep.mubr.bf16.mxu0 %v585
    %1000 = vmatmul.mubr.bf16.gmra.mxu0 %v584
    %v1001 = vpop.f32.mrf.mxu0
    %v1002 = vadd.f32 %v670, %v1001
    %v1003 = vpop.f32.mrf.mxu0
    %v1004 = vadd.f32 %v674, %v1003
    %v1005 = vpop.f32.mrf.mxu0
    %v1006 = vadd.f32 %v670, %v1005
    %v1007 = vpop.f32.mrf.mxu0
    %v1008 = vadd.f32 %v674, %v1007
    %1009 = vmatprep.mubr.bf16.mxu0 %v588
    %1010 = vmatmul.mubr.bf16.gmra.mxu0 %v587
    %v1011 = vpop.f32.mrf.mxu0
    %v1012 = vadd.f32 %v670, %v1011
    %v1013 = vpop.f32.mrf.mxu0
    %v1014 = vadd.f32 %v674, %v1013
    %v1015 = vpop.f32.mrf.mxu0
    %v1016 = vadd.f32 %v670, %v1015
    %v1017 = vpop.f32.mrf.mxu0
    %v1018 = vadd.f32 %v674, %v1017
    %1019 = vmatprep.mubr.bf16.mxu0 %v591
    %1020 = vmatmul.mubr.bf16.gmra.mxu0 %v590
    %v1021 = vpop.f32.mrf.mxu0
    %v1022 = vadd.f32 %v670, %v1021
    %v1023 = vpop.f32.mrf.mxu0
    %v1024 = vadd.f32 %v674, %v1023
    %v1025 = vpop.f32.mrf.mxu0
    %v1026 = vadd.f32 %v670, %v1025
    %v1027 = vpop.f32.mrf.mxu0
    %v1028 = vadd.f32 %v674, %v1027
    %1029 = vmatprep.mubr.bf16.mxu0 %v594
    %1030 = vmatmul.mubr.bf16.gmra.mxu0 %v593
    %v1031 = vpop.f32.mrf.mxu0
    %v1032 = vadd.f32 %v670, %v1031
    %v1033 = vpop.f32.mrf.mxu0
    %v1034 = vadd.f32 %v674, %v1033
    %v1035 = vpop.f32.mrf.mxu0
    %v1036 = vadd.f32 %v670, %v1035
    %v1037 = vpop.f32.mrf.mxu0
    %v1038 = vadd.f32 %v674, %v1037
    %1039 = vmatprep.mubr.bf16.mxu0 %v597
    %1040 = vmatmul.mubr.bf16.gmra.mxu0 %v596
    %v1041 = vpop.f32.mrf.mxu0
    %v1042 = vadd.f32 %v670, %v1041
    %v1043 = vpop.f32.mrf.mxu0
    %v1044 = vadd.f32 %v674, %v1043
    %v1045 = vpop.f32.mrf.mxu0
    %v1046 = vadd.f32 %v670, %v1045
    %v1047 = vpop.f32.mrf.mxu0
    %v1048 = vadd.f32 %v674, %v1047
    %1049 = vmatprep.mubr.bf16.mxu0 %v600
    %1050 = vmatmul.mubr.bf16.gmra.mxu0 %v599
    %v1051 = vpop.f32.mrf.mxu0
    %v1052 = vadd.f32 %v670, %v1051
    %v1053 = vpop.f32.mrf.mxu0
    %v1054 = vadd.f32 %v674, %v1053
    %v1055 = vpop.f32.mrf.mxu0
    %v1056 = vadd.f32 %v670, %v1055
    %v1057 = vpop.f32.mrf.mxu0
    %v1058 = vadd.f32 %v674, %v1057
    %1059 = vmatprep.mubr.bf16.mxu0 %v603
    %1060 = vmatmul.mubr.bf16.gmra.mxu0 %v602
    %v1061 = vpop.f32.mrf.mxu0
    %v1062 = vadd.f32 %v670, %v1061
    %v1063 = vpop.f32.mrf.mxu0
    %v1064 = vadd.f32 %v674, %v1063
    %v1065 = vpop.f32.mrf.mxu0
    %v1066 = vadd.f32 %v670, %v1065
    %v1067 = vpop.f32.mrf.mxu0
    %v1068 = vadd.f32 %v674, %v1067
    %1069 = vmatprep.mubr.bf16.mxu0 %v606
    %1070 = vmatmul.mubr.bf16.gmra.mxu0 %v605
    %v1071 = vpop.f32.mrf.mxu0
    %v1072 = vadd.f32 %v670, %v1071
    %v1073 = vpop.f32.mrf.mxu0
    %v1074 = vadd.f32 %v674, %v1073
    %v1075 = vpop.f32.mrf.mxu0
    %v1076 = vadd.f32 %v670, %v1075
    %v1077 = vpop.f32.mrf.mxu0
    %v1078 = vadd.f32 %v674, %v1077
    %1079 = vmatprep.mubr.bf16.mxu0 %v609
    %1080 = vmatmul.mubr.bf16.gmra.mxu0 %v608
    %v1081 = vpop.f32.mrf.mxu0
    %v1082 = vadd.f32 %v670, %v1081
    %v1083 = vpop.f32.mrf.mxu0
    %v1084 = vadd.f32 %v674, %v1083
    %v1085 = vpop.f32.mrf.mxu0
    %v1086 = vadd.f32 %v670, %v1085
    %v1087 = vpop.f32.mrf.mxu0
    %v1088 = vadd.f32 %v674, %v1087
    %1089 = vmatprep.mubr.bf16.mxu0 %v612
    %1090 = vmatmul.mubr.bf16.gmra.mxu0 %v611
    %v1091 = vpop.f32.mrf.mxu0
    %v1092 = vadd.f32 %v670, %v1091
    %v1093 = vpop.f32.mrf.mxu0
    %v1094 = vadd.f32 %v674, %v1093
    %v1095 = vpop.f32.mrf.mxu0
    %v1096 = vadd.f32 %v670, %v1095
    %v1097 = vpop.f32.mrf.mxu0
    %v1098 = vadd.f32 %v674, %v1097
    %1099 = vmatprep.mubr.bf16.mxu0 %v615
    %1100 = vmatmul.mubr.bf16.gmra.mxu0 %v614
    %v1101 = vpop.f32.mrf.mxu0
    %v1102 = vadd.f32 %v670, %v1101
    %v1103 = vpop.f32.mrf.mxu0
    %v1104 = vadd.f32 %v674, %v1103
    %v1105 = vpop.f32.mrf.mxu0
    %v1106 = vadd.f32 %v670, %v1105
    %v1107 = vpop.f32.mrf.mxu0
    %v1108 = vadd.f32 %v674, %v1107
    %1109 = vdwg.mxu0
    %1110 = vmatprep.subr.bf16.mxu0 %v868
    %1111 = vmatpush1.bf16.msra.mxu0 %v867
    %1112 = vmatprep.subr.bf16.mxu0 %v866
    %1113 = vmatpush1.bf16.msra.mxu0 %v865
    %1114 = vmatprep.subr.bf16.mxu0 %v864
    %1115 = vmatpush1.bf16.msra.mxu0 %v863
    %1116 = vmatprep.subr.bf16.mxu0 %v862
    %1117 = vmatpush1.bf16.msra.mxu0 %v861
    %1118 = vmatprep.subr.bf16.mxu0 %v860
    %1119 = vmatpush1.bf16.msra.mxu0 %v859
    %1120 = vmatprep.subr.bf16.mxu0 %v858
    %1121 = vmatpush1.bf16.msra.mxu0 %v857
    %1122 = vmatprep.subr.bf16.mxu0 %v856
    %1123 = vmatpush1.bf16.msra.mxu0 %v855
    %1124 = vmatprep.subr.bf16.mxu0 %v854
    %1125 = vmatpush1.bf16.msra.mxu0 %v853
    %1126 = vmatprep.subr.bf16.mxu0 0
    %1127 = vmatpush2.bf16.msra.mxu0 0
    %1128 = vmatprep.subr.bf16.mxu0 0
    %1129 = vmatpush2.bf16.msra.mxu0 0
    %1130 = vmatprep.subr.bf16.mxu0 0
    %1131 = vmatpush2.bf16.msra.mxu0 0
    %1132 = vmatprep.subr.bf16.mxu0 0
    %1133 = vmatpush2.bf16.msra.mxu0 0
    %1134 = vmatprep.subr.bf16.mxu0 0
    %1135 = vmatpush2.bf16.msra.mxu0 0
    %1136 = vmatprep.subr.bf16.mxu0 0
    %1137 = vmatpush2.bf16.msra.mxu0 0
    %1138 = vmatprep.subr.bf16.mxu0 0
    %1139 = vmatpush2.bf16.msra.mxu0 0
    %1140 = vmatprep.subr.bf16.mxu0 0
    %1141 = vmatpush2.bf16.msra.mxu0 0
    %1142 = vmatprep.mubr.bf16.mxu0 0
    %1143 = vmatmul.mubr.bf16.gmra.mxu0 %v571
    %v1144 = vpop.f32.mrf.mxu0
    %v1145 = vadd.f32 %v952, %v1144
    %v1146 = vpop.f32.mrf.mxu0
    %v1147 = vadd.f32 %v954, %v1146
    %v1148 = vpop.f32.mrf.mxu0
    %v1149 = vadd.f32 %v956, %v1148
    %v1150 = vpop.f32.mrf.mxu0
    %v1151 = vadd.f32 %v958, %v1150
    %1152 = vmatprep.mubr.bf16.mxu0 0
    %1153 = vmatmul.mubr.bf16.gmra.mxu0 %v574
    %v1154 = vpop.f32.mrf.mxu0
    %v1155 = vadd.f32 %v962, %v1154
    %v1156 = vpop.f32.mrf.mxu0
    %v1157 = vadd.f32 %v964, %v1156
    %v1158 = vpop.f32.mrf.mxu0
    %v1159 = vadd.f32 %v966, %v1158
    %v1160 = vpop.f32.mrf.mxu0
    %v1161 = vadd.f32 %v968, %v1160
    %1162 = vmatprep.mubr.bf16.mxu0 0
    %1163 = vmatmul.mubr.bf16.gmra.mxu0 %v577
    %v1164 = vpop.f32.mrf.mxu0
    %v1165 = vadd.f32 %v972, %v1164
    %v1166 = vpop.f32.mrf.mxu0
    %v1167 = vadd.f32 %v974, %v1166
    %v1168 = vpop.f32.mrf.mxu0
    %v1169 = vadd.f32 %v976, %v1168
    %v1170 = vpop.f32.mrf.mxu0
    %v1171 = vadd.f32 %v978, %v1170
    %1172 = vmatprep.mubr.bf16.mxu0 0
    %1173 = vmatmul.mubr.bf16.gmra.mxu0 %v580
    %v1174 = vpop.f32.mrf.mxu0
    %v1175 = vadd.f32 %v982, %v1174
    %v1176 = vpop.f32.mrf.mxu0
    %v1177 = vadd.f32 %v984, %v1176
    %v1178 = vpop.f32.mrf.mxu0
    %v1179 = vadd.f32 %v986, %v1178
    %v1180 = vpop.f32.mrf.mxu0
    %v1181 = vadd.f32 %v988, %v1180
    %1182 = vmatprep.mubr.bf16.mxu0 0
    %1183 = vmatmul.mubr.bf16.gmra.mxu0 %v583
    %v1184 = vpop.f32.mrf.mxu0
    %v1185 = vadd.f32 %v992, %v1184
    %v1186 = vpop.f32.mrf.mxu0
    %v1187 = vadd.f32 %v994, %v1186
    %v1188 = vpop.f32.mrf.mxu0
    %v1189 = vadd.f32 %v996, %v1188
    %v1190 = vpop.f32.mrf.mxu0
    %v1191 = vadd.f32 %v998, %v1190
    %1192 = vmatprep.mubr.bf16.mxu0 0
    %1193 = vmatmul.mubr.bf16.gmra.mxu0 %v586
    %v1194 = vpop.f32.mrf.mxu0
    %v1195 = vadd.f32 %v1002, %v1194
    %v1196 = vpop.f32.mrf.mxu0
    %v1197 = vadd.f32 %v1004, %v1196
    %v1198 = vpop.f32.mrf.mxu0
    %v1199 = vadd.f32 %v1006, %v1198
    %v1200 = vpop.f32.mrf.mxu0
    %v1201 = vadd.f32 %v1008, %v1200
    %1202 = vmatprep.mubr.bf16.mxu0 0
    %1203 = vmatmul.mubr.bf16.gmra.mxu0 %v589
    %v1204 = vpop.f32.mrf.mxu0
    %v1205 = vadd.f32 %v1012, %v1204
    %v1206 = vpop.f32.mrf.mxu0
    %v1207 = vadd.f32 %v1014, %v1206
    %v1208 = vpop.f32.mrf.mxu0
    %v1209 = vadd.f32 %v1016, %v1208
    %v1210 = vpop.f32.mrf.mxu0
    %v1211 = vadd.f32 %v1018, %v1210
    %1212 = vmatprep.mubr.bf16.mxu0 0
    %1213 = vmatmul.mubr.bf16.gmra.mxu0 %v592
    %v1214 = vpop.f32.mrf.mxu0
    %v1215 = vadd.f32 %v1022, %v1214
    %v1216 = vpop.f32.mrf.mxu0
    %v1217 = vadd.f32 %v1024, %v1216
    %v1218 = vpop.f32.mrf.mxu0
    %v1219 = vadd.f32 %v1026, %v1218
    %v1220 = vpop.f32.mrf.mxu0
    %v1221 = vadd.f32 %v1028, %v1220
    %1222 = vmatprep.mubr.bf16.mxu0 0
    %1223 = vmatmul.mubr.bf16.gmra.mxu0 %v595
    %v1224 = vpop.f32.mrf.mxu0
    %v1225 = vadd.f32 %v1032, %v1224
    %v1226 = vpop.f32.mrf.mxu0
    %v1227 = vadd.f32 %v1034, %v1226
    %v1228 = vpop.f32.mrf.mxu0
    %v1229 = vadd.f32 %v1036, %v1228
    %v1230 = vpop.f32.mrf.mxu0
    %v1231 = vadd.f32 %v1038, %v1230
    %1232 = vmatprep.mubr.bf16.mxu0 0
    %1233 = vmatmul.mubr.bf16.gmra.mxu0 %v598
    %v1234 = vpop.f32.mrf.mxu0
    %v1235 = vadd.f32 %v1042, %v1234
    %v1236 = vpop.f32.mrf.mxu0
    %v1237 = vadd.f32 %v1044, %v1236
    %v1238 = vpop.f32.mrf.mxu0
    %v1239 = vadd.f32 %v1046, %v1238
    %v1240 = vpop.f32.mrf.mxu0
    %v1241 = vadd.f32 %v1048, %v1240
    %1242 = vmatprep.mubr.bf16.mxu0 0
    %1243 = vmatmul.mubr.bf16.gmra.mxu0 %v601
    %v1244 = vpop.f32.mrf.mxu0
    %v1245 = vadd.f32 %v1052, %v1244
    %v1246 = vpop.f32.mrf.mxu0
    %v1247 = vadd.f32 %v1054, %v1246
    %v1248 = vpop.f32.mrf.mxu0
    %v1249 = vadd.f32 %v1056, %v1248
    %v1250 = vpop.f32.mrf.mxu0
    %v1251 = vadd.f32 %v1058, %v1250
    %1252 = vmatprep.mubr.bf16.mxu0 0
    %1253 = vmatmul.mubr.bf16.gmra.mxu0 %v604
    %v1254 = vpop.f32.mrf.mxu0
    %v1255 = vadd.f32 %v1062, %v1254
    %v1256 = vpop.f32.mrf.mxu0
    %v1257 = vadd.f32 %v1064, %v1256
    %v1258 = vpop.f32.mrf.mxu0
    %v1259 = vadd.f32 %v1066, %v1258
    %v1260 = vpop.f32.mrf.mxu0
    %v1261 = vadd.f32 %v1068, %v1260
    %1262 = vmatprep.mubr.bf16.mxu0 0
    %1263 = vmatmul.mubr.bf16.gmra.mxu0 %v607
    %v1264 = vpop.f32.mrf.mxu0
    %v1265 = vadd.f32 %v1072, %v1264
    %v1266 = vpop.f32.mrf.mxu0
    %v1267 = vadd.f32 %v1074, %v1266
    %v1268 = vpop.f32.mrf.mxu0
    %v1269 = vadd.f32 %v1076, %v1268
    %v1270 = vpop.f32.mrf.mxu0
    %v1271 = vadd.f32 %v1078, %v1270
    %1272 = vmatprep.mubr.bf16.mxu0 0
    %1273 = vmatmul.mubr.bf16.gmra.mxu0 %v610
    %v1274 = vpop.f32.mrf.mxu0
    %v1275 = vadd.f32 %v1082, %v1274
    %v1276 = vpop.f32.mrf.mxu0
    %v1277 = vadd.f32 %v1084, %v1276
    %v1278 = vpop.f32.mrf.mxu0
    %v1279 = vadd.f32 %v1086, %v1278
    %v1280 = vpop.f32.mrf.mxu0
    %v1281 = vadd.f32 %v1088, %v1280
    %1282 = vmatprep.mubr.bf16.mxu0 0
    %1283 = vmatmul.mubr.bf16.gmra.mxu0 %v613
    %v1284 = vpop.f32.mrf.mxu0
    %v1285 = vadd.f32 %v1092, %v1284
    %v1286 = vpop.f32.mrf.mxu0
    %v1287 = vadd.f32 %v1094, %v1286
    %v1288 = vpop.f32.mrf.mxu0
    %v1289 = vadd.f32 %v1096, %v1288
    %v1290 = vpop.f32.mrf.mxu0
    %v1291 = vadd.f32 %v1098, %v1290
    %1292 = vmatprep.mubr.bf16.mxu0 0
    %1293 = vmatmul.mubr.bf16.gmra.mxu0 %v616
    %v1294 = vpop.f32.mrf.mxu0
    %v1295 = vadd.f32 %v1102, %v1294
    %v1296 = vpop.f32.mrf.mxu0
    %v1297 = vadd.f32 %v1104, %v1296
    %v1298 = vpop.f32.mrf.mxu0
    %v1299 = vadd.f32 %v1106, %v1298
    %v1300 = vpop.f32.mrf.mxu0
    %v1301 = vadd.f32 %v1108, %v1300
    %1302 = vdwg.mxu0
    %v1303 = vmax.f32 %v1145, 0.0
    %v1304 = vmax.f32 %v1147, 0.0
    %v1305 = vmax.f32 %v1149, 0.0
    %v1306 = vmax.f32 %v1151, 0.0
    %v1307 = vmax.f32 %v1155, 0.0
    %v1308 = vmax.f32 %v1157, 0.0
    %v1309 = vmax.f32 %v1159, 0.0
    %v1310 = vmax.f32 %v1161, 0.0
    %v1311 = vmax.f32 %v1165, 0.0
    %v1312 = vmax.f32 %v1167, 0.0
    %v1313 = vmax.f32 %v1169, 0.0
    %v1314 = vmax.f32 %v1171, 0.0
    %v1315 = vmax.f32 %v1175, 0.0
    %v1316 = vmax.f32 %v1177, 0.0
    %v1317 = vmax.f32 %v1179, 0.0
    %v1318 = vmax.f32 %v1181, 0.0
    %v1319 = vmax.f32 %v1185, 0.0
    %v1320 = vmax.f32 %v1187, 0.0
    %v1321 = vmax.f32 %v1189, 0.0
    %v1322 = vmax.f32 %v1191, 0.0
    %v1323 = vmax.f32 %v1195, 0.0
    %v1324 = vmax.f32 %v1197, 0.0
    %v1325 = vmax.f32 %v1199, 0.0
    %v1326 = vmax.f32 %v1201, 0.0
    %v1327 = vmax.f32 %v1205, 0.0
    %v1328 = vmax.f32 %v1207, 0.0
    %v1329 = vmax.f32 %v1209, 0.0
    %v1330 = vmax.f32 %v1211, 0.0
    %v1331 = vmax.f32 %v1215, 0.0
    %v1332 = vmax.f32 %v1217, 0.0
    %v1333 = vmax.f32 %v1219, 0.0
    %v1334 = vmax.f32 %v1221, 0.0
    %v1335 = vmax.f32 %v1225, 0.0
    %v1336 = vmax.f32 %v1227, 0.0
    %v1337 = vmax.f32 %v1229, 0.0
    %v1338 = vmax.f32 %v1231, 0.0
    %v1339 = vmax.f32 %v1235, 0.0
    %v1340 = vmax.f32 %v1237, 0.0
    %v1341 = vmax.f32 %v1239, 0.0
    %v1342 = vmax.f32 %v1241, 0.0
    %v1343 = vmax.f32 %v1245, 0.0
    %v1344 = vmax.f32 %v1247, 0.0
    %v1345 = vmax.f32 %v1249, 0.0
    %v1346 = vmax.f32 %v1251, 0.0
    %v1347 = vmax.f32 %v1255, 0.0
    %v1348 = vmax.f32 %v1257, 0.0
    %v1349 = vmax.f32 %v1259, 0.0
    %v1350 = vmax.f32 %v1261, 0.0
    %v1351 = vmax.f32 %v1265, 0.0
    %v1352 = vmax.f32 %v1267, 0.0
    %v1353 = vmax.f32 %v1269, 0.0
    %v1354 = vmax.f32 %v1271, 0.0
    %v1355 = vmax.f32 %v1275, 0.0
    %v1356 = vmax.f32 %v1277, 0.0
    %v1357 = vmax.f32 %v1279, 0.0
    %v1358 = vmax.f32 %v1281, 0.0
    %v1359 = vmax.f32 %v1285, 0.0
    %v1360 = vmax.f32 %v1287, 0.0
    %v1361 = vmax.f32 %v1289, 0.0
    %v1362 = vmax.f32 %v1291, 0.0
    %v1363 = vmax.f32 %v1295, 0.0
    %v1364 = vmax.f32 %v1297, 0.0
    %v1365 = vmax.f32 %v1299, 0.0
    %v1366 = vmax.f32 %v1301, 0.0
    %v1367 = vpack.c.bf16 %v1305, %v1303
    %v1368 = vpack.c.bf16 %v1306, %v1304
    %v1369 = vpack.c.bf16 %v1309, %v1307
    %v1370 = vpack.c.bf16 %v1310, %v1308
    %v1371 = vpack.c.bf16 %v1313, %v1311
    %v1372 = vpack.c.bf16 %v1314, %v1312
    %v1373 = vpack.c.bf16 %v1317, %v1315
    %v1374 = vpack.c.bf16 %v1318, %v1316
    %v1375 = vpack.c.bf16 %v1321, %v1319
    %v1376 = vpack.c.bf16 %v1322, %v1320
    %v1377 = vpack.c.bf16 %v1325, %v1323
    %v1378 = vpack.c.bf16 %v1326, %v1324
    %v1379 = vpack.c.bf16 %v1329, %v1327
    %v1380 = vpack.c.bf16 %v1330, %v1328
    %v1381 = vpack.c.bf16 %v1333, %v1331
    %v1382 = vpack.c.bf16 %v1334, %v1332
    %v1383 = vpack.c.bf16 %v1337, %v1335
    %v1384 = vpack.c.bf16 %v1338, %v1336
    %v1385 = vpack.c.bf16 %v1341, %v1339
    %v1386 = vpack.c.bf16 %v1342, %v1340
    %v1387 = vpack.c.bf16 %v1345, %v1343
    %v1388 = vpack.c.bf16 %v1346, %v1344
    %v1389 = vpack.c.bf16 %v1349, %v1347
    %v1390 = vpack.c.bf16 %v1350, %v1348
    %v1391 = vpack.c.bf16 %v1353, %v1351
    %v1392 = vpack.c.bf16 %v1354, %v1352
    %v1393 = vpack.c.bf16 %v1357, %v1355
    %v1394 = vpack.c.bf16 %v1358, %v1356
    %v1395 = vpack.c.bf16 %v1361, %v1359
    %v1396 = vpack.c.bf16 %v1362, %v1360
    %v1397 = vpack.c.bf16 %v1365, %v1363
    %v1398 = vpack.c.bf16 %v1366, %v1364
    %v1399 = vld [vmem:[%s5] sm:$0xf]
    %v1400 = vld [vmem:[%s5 + $0x4] sm:$0xf]
    %v1401 = vld [vmem:[%s5 + $0x8] sm:$0xf]
    %v1402 = vld [vmem:[%s5 + $0xc] sm:$0xf]
    %v1403 = vld [vmem:[%s5 + $0x10] sm:$0xf]
    %v1404 = vld [vmem:[%s5 + $0x14] sm:$0xf]
    %v1405 = vld [vmem:[%s5 + $0x18] sm:$0xf]
    %v1406 = vld [vmem:[%s5 + $0x1c] sm:$0xf]
    %v1407 = vld [vmem:[%s5 + $0x20] sm:$0xf]
    %v1408 = vld [vmem:[%s5 + $0x24] sm:$0xf]
    %v1409 = vld [vmem:[%s5 + $0x28] sm:$0xf]
    %v1410 = vld [vmem:[%s5 + $0x2c] sm:$0xf]
    %v1411 = vld [vmem:[%s5 + $0x30] sm:$0xf]
    %v1412 = vld [vmem:[%s5 + $0x34] sm:$0xf]
    %v1413 = vld [vmem:[%s5 + $0x38] sm:$0xf]
    %v1414 = vld [vmem:[%s5 + $0x3c] sm:$0xf]
    %v1415 = vld [vmem:[%s5 + $0x40] sm:$0xf]
    %v1416 = vld [vmem:[%s5 + $0x44] sm:$0xf]
    %v1417 = vld [vmem:[%s5 + $0x48] sm:$0xf]
    %v1418 = vld [vmem:[%s5 + $0x4c] sm:$0xf]
    %v1419 = vld [vmem:[%s5 + $0x50] sm:$0xf]
    %v1420 = vld [vmem:[%s5 + $0x54] sm:$0xf]
    %v1421 = vld [vmem:[%s5 + $0x58] sm:$0xf]
    %v1422 = vld [vmem:[%s5 + $0x5c] sm:$0xf]
    %v1423 = vld [vmem:[%s5 + $0x60] sm:$0xf]
    %v1424 = vld [vmem:[%s5 + $0x64] sm:$0xf]
    %v1425 = vld [vmem:[%s5 + $0x68] sm:$0xf]
    %v1426 = vld [vmem:[%s5 + $0x6c] sm:$0xf]
    %v1427 = vld [vmem:[%s5 + $0x70] sm:$0xf]
    %v1428 = vld [vmem:[%s5 + $0x74] sm:$0xf]
    %v1429 = vld [vmem:[%s5 + $0x78] sm:$0xf]
    %v1430 = vld [vmem:[%s5 + $0x7c] sm:$0xf]
    %v1431 = vld [vmem:[%s6] sm:$0x1]
    %v1433 = vlaneseq
    %v1434 = vshrl.u32 %v1433, 7
    %v1435 = vsub.s32 0, %v1434
    %v1436 = vrot.slane %v1431, %v1435
    %v1470 = vunpack.c.l.b16 %v1399
    %v1471 = vunpack.c.l.b16 %v1400
    %v1472 = vunpack.c.l.b16 %v1401
    %v1473 = vunpack.c.l.b16 %v1402
    %v1474 = vunpack.c.l.b16 %v1403
    %v1475 = vunpack.c.l.b16 %v1404
    %v1476 = vunpack.c.l.b16 %v1405
    %v1477 = vunpack.c.l.b16 %v1406
    %v1478 = vunpack.c.l.b16 %v1407
    %v1479 = vunpack.c.l.b16 %v1408
    %v1480 = vunpack.c.l.b16 %v1409
    %v1481 = vunpack.c.l.b16 %v1410
    %v1482 = vunpack.c.l.b16 %v1411
    %v1483 = vunpack.c.l.b16 %v1412
    %v1484 = vunpack.c.l.b16 %v1413
    %v1485 = vunpack.c.l.b16 %v1414
    %v1486 = vunpack.c.l.b16 %v1415
    %v1487 = vunpack.c.l.b16 %v1416
    %v1488 = vunpack.c.l.b16 %v1417
    %v1489 = vunpack.c.l.b16 %v1418
    %v1490 = vunpack.c.l.b16 %v1419
    %v1491 = vunpack.c.l.b16 %v1420
    %v1492 = vunpack.c.l.b16 %v1421
    %v1493 = vunpack.c.l.b16 %v1422
    %v1494 = vunpack.c.l.b16 %v1423
    %v1495 = vunpack.c.l.b16 %v1424
    %v1496 = vunpack.c.l.b16 %v1425
    %v1497 = vunpack.c.l.b16 %v1426
    %v1498 = vunpack.c.l.b16 %v1427
    %v1499 = vunpack.c.l.b16 %v1428
    %v1500 = vunpack.c.l.b16 %v1429
    %v1501 = vunpack.c.l.b16 %v1430
    %v1502 = vpack.c.b16 %v1471, %v1470
    %v1503 = vpack.c.b16 %v1473, %v1472
    %v1504 = vpack.c.b16 %v1475, %v1474
    %v1505 = vpack.c.b16 %v1477, %v1476
    %v1506 = vpack.c.b16 %v1479, %v1478
    %v1507 = vpack.c.b16 %v1481, %v1480
    %v1508 = vpack.c.b16 %v1483, %v1482
    %v1509 = vpack.c.b16 %v1485, %v1484
    %v1510 = vpack.c.b16 %v1487, %v1486
    %v1511 = vpack.c.b16 %v1489, %v1488
    %v1512 = vpack.c.b16 %v1491, %v1490
    %v1513 = vpack.c.b16 %v1493, %v1492
    %v1514 = vpack.c.b16 %v1495, %v1494
    %v1515 = vpack.c.b16 %v1497, %v1496
    %v1516 = vpack.c.b16 %v1499, %v1498
    %v1517 = vpack.c.b16 %v1501, %v1500
    %1534 = vmatprep.subr.bf16.mxu0 0
    %1535 = vmatpush1.bf16.msra.mxu0 %v1509
    %1536 = vmatprep.subr.bf16.mxu0 0
    %1537 = vmatpush1.bf16.msra.mxu0 %v1508
    %1538 = vmatprep.subr.bf16.mxu0 0
    %1539 = vmatpush1.bf16.msra.mxu0 %v1507
    %1540 = vmatprep.subr.bf16.mxu0 0
    %1541 = vmatpush1.bf16.msra.mxu0 %v1506
    %1542 = vmatprep.subr.bf16.mxu0 0
    %1543 = vmatpush1.bf16.msra.mxu0 %v1505
    %1544 = vmatprep.subr.bf16.mxu0 0
    %1545 = vmatpush1.bf16.msra.mxu0 %v1504
    %1546 = vmatprep.subr.bf16.mxu0 0
    %1547 = vmatpush1.bf16.msra.mxu0 %v1503
    %1548 = vmatprep.subr.bf16.mxu0 0
    %1549 = vmatpush1.bf16.msra.mxu0 %v1502
    %1550 = vmatprep.subr.bf16.mxu0 0
    %1551 = vmatpush2.bf16.msra.mxu0 %v1517
    %1552 = vmatprep.subr.bf16.mxu0 0
    %1553 = vmatpush2.bf16.msra.mxu0 %v1516
    %1554 = vmatprep.subr.bf16.mxu0 0
    %1555 = vmatpush2.bf16.msra.mxu0 %v1515
    %1556 = vmatprep.subr.bf16.mxu0 0
    %1557 = vmatpush2.bf16.msra.mxu0 %v1514
    %1558 = vmatprep.subr.bf16.mxu0 0
    %1559 = vmatpush2.bf16.msra.mxu0 %v1513
    %1560 = vmatprep.subr.bf16.mxu0 0
    %1561 = vmatpush2.bf16.msra.mxu0 %v1512
    %1562 = vmatprep.subr.bf16.mxu0 0
    %1563 = vmatpush2.bf16.msra.mxu0 %v1511
    %1564 = vmatprep.subr.bf16.mxu0 0
    %1565 = vmatpush2.bf16.msra.mxu0 %v1510
    %1566 = vmatprep.mubr.bf16.mxu0 %v1368
    %1567 = vmatmul.mubr.bf16.gmra.mxu0 %v1367
    %v1568 = vpop.f32.mrf.mxu0
    %v1569 = vadd.f32 %v1436, %v1568
    %v1570 = vpop.f32.mrf.mxu0
    %v1571 = vpop.f32.mrf.mxu0
    %v1572 = vadd.f32 %v1436, %v1571
    %v1573 = vpop.f32.mrf.mxu0
    %1574 = vmatprep.mubr.bf16.mxu0 %v1370
    %1575 = vmatmul.mubr.bf16.gmra.mxu0 %v1369
    %v1576 = vpop.f32.mrf.mxu0
    %v1577 = vadd.f32 %v1436, %v1576
    %v1578 = vpop.f32.mrf.mxu0
    %v1579 = vpop.f32.mrf.mxu0
    %v1580 = vadd.f32 %v1436, %v1579
    %v1581 = vpop.f32.mrf.mxu0
    %1582 = vmatprep.mubr.bf16.mxu0 %v1372
    %1583 = vmatmul.mubr.bf16.gmra.mxu0 %v1371
    %v1584 = vpop.f32.mrf.mxu0
    %v1585 = vadd.f32 %v1436, %v1584
    %v1586 = vpop.f32.mrf.mxu0
    %v1587 = vpop.f32.mrf.mxu0
    %v1588 = vadd.f32 %v1436, %v1587
    %v1589 = vpop.f32.mrf.mxu0
    %1590 = vmatprep.mubr.bf16.mxu0 %v1374
    %1591 = vmatmul.mubr.bf16.gmra.mxu0 %v1373
    %v1592 = vpop.f32.mrf.mxu0
    %v1593 = vadd.f32 %v1436, %v1592
    %v1594 = vpop.f32.mrf.mxu0
    %v1595 = vpop.f32.mrf.mxu0
    %v1596 = vadd.f32 %v1436, %v1595
    %v1597 = vpop.f32.mrf.mxu0
    %1598 = vmatprep.mubr.bf16.mxu0 %v1376
    %1599 = vmatmul.mubr.bf16.gmra.mxu0 %v1375
    %v1600 = vpop.f32.mrf.mxu0
    %v1601 = vadd.f32 %v1436, %v1600
    %v1602 = vpop.f32.mrf.mxu0
    %v1603 = vpop.f32.mrf.mxu0
    %v1604 = vadd.f32 %v1436, %v1603
    %v1605 = vpop.f32.mrf.mxu0
    %1606 = vmatprep.mubr.bf16.mxu0 %v1378
    %1607 = vmatmul.mubr.bf16.gmra.mxu0 %v1377
    %v1608 = vpop.f32.mrf.mxu0
    %v1609 = vadd.f32 %v1436, %v1608
    %v1610 = vpop.f32.mrf.mxu0
    %v1611 = vpop.f32.mrf.mxu0
    %v1612 = vadd.f32 %v1436, %v1611
    %v1613 = vpop.f32.mrf.mxu0
    %1614 = vmatprep.mubr.bf16.mxu0 %v1380
    %1615 = vmatmul.mubr.bf16.gmra.mxu0 %v1379
    %v1616 = vpop.f32.mrf.mxu0
    %v1617 = vadd.f32 %v1436, %v1616
    %v1618 = vpop.f32.mrf.mxu0
    %v1619 = vpop.f32.mrf.mxu0
    %v1620 = vadd.f32 %v1436, %v1619
    %v1621 = vpop.f32.mrf.mxu0
    %1622 = vmatprep.mubr.bf16.mxu0 %v1382
    %1623 = vmatmul.mubr.bf16.gmra.mxu0 %v1381
    %v1624 = vpop.f32.mrf.mxu0
    %v1625 = vadd.f32 %v1436, %v1624
    %v1626 = vpop.f32.mrf.mxu0
    %v1627 = vpop.f32.mrf.mxu0
    %v1628 = vadd.f32 %v1436, %v1627
    %v1629 = vpop.f32.mrf.mxu0
    %1630 = vmatprep.mubr.bf16.mxu0 %v1384
    %1631 = vmatmul.mubr.bf16.gmra.mxu0 %v1383
    %v1632 = vpop.f32.mrf.mxu0
    %v1633 = vadd.f32 %v1436, %v1632
    %v1634 = vpop.f32.mrf.mxu0
    %v1635 = vpop.f32.mrf.mxu0
    %v1636 = vadd.f32 %v1436, %v1635
    %v1637 = vpop.f32.mrf.mxu0
    %1638 = vmatprep.mubr.bf16.mxu0 %v1386
    %1639 = vmatmul.mubr.bf16.gmra.mxu0 %v1385
    %v1640 = vpop.f32.mrf.mxu0
    %v1641 = vadd.f32 %v1436, %v1640
    %v1642 = vpop.f32.mrf.mxu0
    %v1643 = vpop.f32.mrf.mxu0
    %v1644 = vadd.f32 %v1436, %v1643
    %v1645 = vpop.f32.mrf.mxu0
    %1646 = vmatprep.mubr.bf16.mxu0 %v1388
    %1647 = vmatmul.mubr.bf16.gmra.mxu0 %v1387
    %v1648 = vpop.f32.mrf.mxu0
    %v1649 = vadd.f32 %v1436, %v1648
    %v1650 = vpop.f32.mrf.mxu0
    %v1651 = vpop.f32.mrf.mxu0
    %v1652 = vadd.f32 %v1436, %v1651
    %v1653 = vpop.f32.mrf.mxu0
    %1654 = vmatprep.mubr.bf16.mxu0 %v1390
    %1655 = vmatmul.mubr.bf16.gmra.mxu0 %v1389
    %v1656 = vpop.f32.mrf.mxu0
    %v1657 = vadd.f32 %v1436, %v1656
    %v1658 = vpop.f32.mrf.mxu0
    %v1659 = vpop.f32.mrf.mxu0
    %v1660 = vadd.f32 %v1436, %v1659
    %v1661 = vpop.f32.mrf.mxu0
    %1662 = vmatprep.mubr.bf16.mxu0 %v1392
    %1663 = vmatmul.mubr.bf16.gmra.mxu0 %v1391
    %v1664 = vpop.f32.mrf.mxu0
    %v1665 = vadd.f32 %v1436, %v1664
    %v1666 = vpop.f32.mrf.mxu0
    %v1667 = vpop.f32.mrf.mxu0
    %v1668 = vadd.f32 %v1436, %v1667
    %v1669 = vpop.f32.mrf.mxu0
    %1670 = vmatprep.mubr.bf16.mxu0 %v1394
    %1671 = vmatmul.mubr.bf16.gmra.mxu0 %v1393
    %v1672 = vpop.f32.mrf.mxu0
    %v1673 = vadd.f32 %v1436, %v1672
    %v1674 = vpop.f32.mrf.mxu0
    %v1675 = vpop.f32.mrf.mxu0
    %v1676 = vadd.f32 %v1436, %v1675
    %v1677 = vpop.f32.mrf.mxu0
    %1678 = vmatprep.mubr.bf16.mxu0 %v1396
    %1679 = vmatmul.mubr.bf16.gmra.mxu0 %v1395
    %v1680 = vpop.f32.mrf.mxu0
    %v1681 = vadd.f32 %v1436, %v1680
    %v1682 = vpop.f32.mrf.mxu0
    %v1683 = vpop.f32.mrf.mxu0
    %v1684 = vadd.f32 %v1436, %v1683
    %v1685 = vpop.f32.mrf.mxu0
    %1686 = vmatprep.mubr.bf16.mxu0 %v1398
    %1687 = vmatmul.mubr.bf16.gmra.mxu0 %v1397
    %v1688 = vpop.f32.mrf.mxu0
    %v1689 = vadd.f32 %v1436, %v1688
    %v1690 = vpop.f32.mrf.mxu0
    %v1691 = vpop.f32.mrf.mxu0
    %v1692 = vadd.f32 %v1436, %v1691
    %v1693 = vpop.f32.mrf.mxu0
    %1694 = vdwg.mxu0
    %v1695 = vmax.f32 %v1569, 0.0
    %v1696 = vmax.f32 %v1572, 0.0
    %v1697 = vmax.f32 %v1577, 0.0
    %v1698 = vmax.f32 %v1580, 0.0
    %v1699 = vmax.f32 %v1585, 0.0
    %v1700 = vmax.f32 %v1588, 0.0
    %v1701 = vmax.f32 %v1593, 0.0
    %v1702 = vmax.f32 %v1596, 0.0
    %v1703 = vmax.f32 %v1601, 0.0
    %v1704 = vmax.f32 %v1604, 0.0
    %v1705 = vmax.f32 %v1609, 0.0
    %v1706 = vmax.f32 %v1612, 0.0
    %v1707 = vmax.f32 %v1617, 0.0
    %v1708 = vmax.f32 %v1620, 0.0
    %v1709 = vmax.f32 %v1625, 0.0
    %v1710 = vmax.f32 %v1628, 0.0
    %v1711 = vmax.f32 %v1633, 0.0
    %v1712 = vmax.f32 %v1636, 0.0
    %v1713 = vmax.f32 %v1641, 0.0
    %v1714 = vmax.f32 %v1644, 0.0
    %v1715 = vmax.f32 %v1649, 0.0
    %v1716 = vmax.f32 %v1652, 0.0
    %v1717 = vmax.f32 %v1657, 0.0
    %v1718 = vmax.f32 %v1660, 0.0
    %v1719 = vmax.f32 %v1665, 0.0
    %v1720 = vmax.f32 %v1668, 0.0
    %v1721 = vmax.f32 %v1673, 0.0
    %v1722 = vmax.f32 %v1676, 0.0
    %v1723 = vmax.f32 %v1681, 0.0
    %v1724 = vmax.f32 %v1684, 0.0
    %v1725 = vmax.f32 %v1689, 0.0
    %v1726 = vmax.f32 %v1692, 0.0
    %v1727 = vpack.c.bf16 %v1696, %v1695
    %v1728 = vpack.c.bf16 %v1698, %v1697
    %v1729 = vpack.c.bf16 %v1700, %v1699
    %v1730 = vpack.c.bf16 %v1702, %v1701
    %v1731 = vpack.c.bf16 %v1704, %v1703
    %v1732 = vpack.c.bf16 %v1706, %v1705
    %v1733 = vpack.c.bf16 %v1708, %v1707
    %v1734 = vpack.c.bf16 %v1710, %v1709
    %v1735 = vpack.c.bf16 %v1712, %v1711
    %v1736 = vpack.c.bf16 %v1714, %v1713
    %v1737 = vpack.c.bf16 %v1716, %v1715
    %v1738 = vpack.c.bf16 %v1718, %v1717
    %v1739 = vpack.c.bf16 %v1720, %v1719
    %v1740 = vpack.c.bf16 %v1722, %v1721
    %v1741 = vpack.c.bf16 %v1724, %v1723
    %v1742 = vpack.c.bf16 %v1726, %v1725
    %v1743 = vld [vmem:[%s7] sm:$0xf]
    %v1744 = vld [vmem:[%s7 + $0x4] sm:$0xf]
    %v1745 = vld [vmem:[%s7 + $0x8] sm:$0xf]
    %v1746 = vld [vmem:[%s7 + $0xc] sm:$0xf]
    %v1747 = vld [vmem:[%s7 + $0x10] sm:$0xf]
    %v1748 = vld [vmem:[%s7 + $0x14] sm:$0xf]
    %v1749 = vld [vmem:[%s7 + $0x18] sm:$0xf]
    %v1750 = vld [vmem:[%s7 + $0x1c] sm:$0xf]
    %v1751 = vld [vmem:[%s7 + $0x20] sm:$0xf]
    %v1752 = vld [vmem:[%s7 + $0x24] sm:$0xf]
    %v1753 = vld [vmem:[%s7 + $0x28] sm:$0xf]
    %v1754 = vld [vmem:[%s7 + $0x2c] sm:$0xf]
    %v1755 = vld [vmem:[%s7 + $0x30] sm:$0xf]
    %v1756 = vld [vmem:[%s7 + $0x34] sm:$0xf]
    %v1757 = vld [vmem:[%s7 + $0x38] sm:$0xf]
    %v1758 = vld [vmem:[%s7 + $0x3c] sm:$0xf]
    %v1759 = vld [vmem:[%s8] sm:$0x1]
    %v1761 = vlaneseq
    %v1762 = vshrl.u32 %v1761, 7
    %v1763 = vsub.s32 0, %v1762
    %v1764 = vrot.slane %v1759, %v1763
    %v1782 = vunpack.c.l.b16 %v1743
    %v1783 = vunpack.c.l.b16 %v1744
    %v1784 = vunpack.c.l.b16 %v1745
    %v1785 = vunpack.c.l.b16 %v1746
    %v1786 = vunpack.c.l.b16 %v1747
    %v1787 = vunpack.c.l.b16 %v1748
    %v1788 = vunpack.c.l.b16 %v1749
    %v1789 = vunpack.c.l.b16 %v1750
    %v1790 = vunpack.c.l.b16 %v1751
    %v1791 = vunpack.c.l.b16 %v1752
    %v1792 = vunpack.c.l.b16 %v1753
    %v1793 = vunpack.c.l.b16 %v1754
    %v1794 = vunpack.c.l.b16 %v1755
    %v1795 = vunpack.c.l.b16 %v1756
    %v1796 = vunpack.c.l.b16 %v1757
    %v1797 = vunpack.c.l.b16 %v1758
    %v1798 = vpack.c.b16 %v1783, %v1782
    %v1799 = vpack.c.b16 %v1785, %v1784
    %v1800 = vpack.c.b16 %v1787, %v1786
    %v1801 = vpack.c.b16 %v1789, %v1788
    %v1802 = vpack.c.b16 %v1791, %v1790
    %v1803 = vpack.c.b16 %v1793, %v1792
    %v1804 = vpack.c.b16 %v1795, %v1794
    %v1805 = vpack.c.b16 %v1797, %v1796
    %1814 = vmatprep.subr.bf16.mxu0 0
    %1815 = vmatpush1.bf16.msra.mxu0 %v1805
    %1816 = vmatprep.subr.bf16.mxu0 0
    %1817 = vmatpush1.bf16.msra.mxu0 %v1804
    %1818 = vmatprep.subr.bf16.mxu0 0
    %1819 = vmatpush1.bf16.msra.mxu0 %v1803
    %1820 = vmatprep.subr.bf16.mxu0 0
    %1821 = vmatpush1.bf16.msra.mxu0 %v1802
    %1822 = vmatprep.subr.bf16.mxu0 0
    %1823 = vmatpush1.bf16.msra.mxu0 %v1801
    %1824 = vmatprep.subr.bf16.mxu0 0
    %1825 = vmatpush1.bf16.msra.mxu0 %v1800
    %1826 = vmatprep.subr.bf16.mxu0 0
    %1827 = vmatpush1.bf16.msra.mxu0 %v1799
    %1828 = vmatprep.subr.bf16.mxu0 0
    %1829 = vmatpush1.bf16.msra.mxu0 %v1798
    %1830 = vmatprep.subr.bf16.mxu0 0
    %1831 = vmatpush2.bf16.msra.mxu0 0
    %1832 = vmatprep.subr.bf16.mxu0 0
    %1833 = vmatpush2.bf16.msra.mxu0 0
    %1834 = vmatprep.subr.bf16.mxu0 0
    %1835 = vmatpush2.bf16.msra.mxu0 0
    %1836 = vmatprep.subr.bf16.mxu0 0
    %1837 = vmatpush2.bf16.msra.mxu0 0
    %1838 = vmatprep.subr.bf16.mxu0 0
    %1839 = vmatpush2.bf16.msra.mxu0 0
    %1840 = vmatprep.subr.bf16.mxu0 0
    %1841 = vmatpush2.bf16.msra.mxu0 0
    %1842 = vmatprep.subr.bf16.mxu0 0
    %1843 = vmatpush2.bf16.msra.mxu0 0
    %1844 = vmatprep.subr.bf16.mxu0 0
    %1845 = vmatpush2.bf16.msra.mxu0 0
    %1846 = vmatprep.mubr.bf16.mxu0 0
    %1847 = vmatmul.mubr.bf16.gmra.mxu0 %v1727
    %v1848 = vpop.f32.mrf.mxu0
    %v1849 = vadd.f32 %v1764, %v1848
    %v1850 = vpop.f32.mrf.mxu0
    %v1851 = vpop.f32.mrf.mxu0
    %v1852 = vadd.f32 %v1764, %v1851
    %v1853 = vpop.f32.mrf.mxu0
    %1854 = vmatprep.mubr.bf16.mxu0 0
    %1855 = vmatmul.mubr.bf16.gmra.mxu0 %v1728
    %v1856 = vpop.f32.mrf.mxu0
    %v1857 = vadd.f32 %v1764, %v1856
    %v1858 = vpop.f32.mrf.mxu0
    %v1859 = vpop.f32.mrf.mxu0
    %v1860 = vadd.f32 %v1764, %v1859
    %v1861 = vpop.f32.mrf.mxu0
    %1862 = vmatprep.mubr.bf16.mxu0 0
    %1863 = vmatmul.mubr.bf16.gmra.mxu0 %v1729
    %v1864 = vpop.f32.mrf.mxu0
    %v1865 = vadd.f32 %v1764, %v1864
    %v1866 = vpop.f32.mrf.mxu0
    %v1867 = vpop.f32.mrf.mxu0
    %v1868 = vadd.f32 %v1764, %v1867
    %v1869 = vpop.f32.mrf.mxu0
    %1870 = vmatprep.mubr.bf16.mxu0 0
    %1871 = vmatmul.mubr.bf16.gmra.mxu0 %v1730
    %v1872 = vpop.f32.mrf.mxu0
    %v1873 = vadd.f32 %v1764, %v1872
    %v1874 = vpop.f32.mrf.mxu0
    %v1875 = vpop.f32.mrf.mxu0
    %v1876 = vadd.f32 %v1764, %v1875
    %v1877 = vpop.f32.mrf.mxu0
    %1878 = vmatprep.mubr.bf16.mxu0 0
    %1879 = vmatmul.mubr.bf16.gmra.mxu0 %v1731
    %v1880 = vpop.f32.mrf.mxu0
    %v1881 = vadd.f32 %v1764, %v1880
    %v1882 = vpop.f32.mrf.mxu0
    %v1883 = vpop.f32.mrf.mxu0
    %v1884 = vadd.f32 %v1764, %v1883
    %v1885 = vpop.f32.mrf.mxu0
    %1886 = vmatprep.mubr.bf16.mxu0 0
    %1887 = vmatmul.mubr.bf16.gmra.mxu0 %v1732
    %v1888 = vpop.f32.mrf.mxu0
    %v1889 = vadd.f32 %v1764, %v1888
    %v1890 = vpop.f32.mrf.mxu0
    %v1891 = vpop.f32.mrf.mxu0
    %v1892 = vadd.f32 %v1764, %v1891
    %v1893 = vpop.f32.mrf.mxu0
    %1894 = vmatprep.mubr.bf16.mxu0 0
    %1895 = vmatmul.mubr.bf16.gmra.mxu0 %v1733
    %v1896 = vpop.f32.mrf.mxu0
    %v1897 = vadd.f32 %v1764, %v1896
    %v1898 = vpop.f32.mrf.mxu0
    %v1899 = vpop.f32.mrf.mxu0
    %v1900 = vadd.f32 %v1764, %v1899
    %v1901 = vpop.f32.mrf.mxu0
    %1902 = vmatprep.mubr.bf16.mxu0 0
    %1903 = vmatmul.mubr.bf16.gmra.mxu0 %v1734
    %v1904 = vpop.f32.mrf.mxu0
    %v1905 = vadd.f32 %v1764, %v1904
    %v1906 = vpop.f32.mrf.mxu0
    %v1907 = vpop.f32.mrf.mxu0
    %v1908 = vadd.f32 %v1764, %v1907
    %v1909 = vpop.f32.mrf.mxu0
    %1910 = vmatprep.mubr.bf16.mxu0 0
    %1911 = vmatmul.mubr.bf16.gmra.mxu0 %v1735
    %v1912 = vpop.f32.mrf.mxu0
    %v1913 = vadd.f32 %v1764, %v1912
    %v1914 = vpop.f32.mrf.mxu0
    %v1915 = vpop.f32.mrf.mxu0
    %v1916 = vadd.f32 %v1764, %v1915
    %v1917 = vpop.f32.mrf.mxu0
    %1918 = vmatprep.mubr.bf16.mxu0 0
    %1919 = vmatmul.mubr.bf16.gmra.mxu0 %v1736
    %v1920 = vpop.f32.mrf.mxu0
    %v1921 = vadd.f32 %v1764, %v1920
    %v1922 = vpop.f32.mrf.mxu0
    %v1923 = vpop.f32.mrf.mxu0
    %v1924 = vadd.f32 %v1764, %v1923
    %v1925 = vpop.f32.mrf.mxu0
    %1926 = vmatprep.mubr.bf16.mxu0 0
    %1927 = vmatmul.mubr.bf16.gmra.mxu0 %v1737
    %v1928 = vpop.f32.mrf.mxu0
    %v1929 = vadd.f32 %v1764, %v1928
    %v1930 = vpop.f32.mrf.mxu0
    %v1931 = vpop.f32.mrf.mxu0
    %v1932 = vadd.f32 %v1764, %v1931
    %v1933 = vpop.f32.mrf.mxu0
    %1934 = vmatprep.mubr.bf16.mxu0 0
    %1935 = vmatmul.mubr.bf16.gmra.mxu0 %v1738
    %v1936 = vpop.f32.mrf.mxu0
    %v1937 = vadd.f32 %v1764, %v1936
    %v1938 = vpop.f32.mrf.mxu0
    %v1939 = vpop.f32.mrf.mxu0
    %v1940 = vadd.f32 %v1764, %v1939
    %v1941 = vpop.f32.mrf.mxu0
    %1942 = vmatprep.mubr.bf16.mxu0 0
    %1943 = vmatmul.mubr.bf16.gmra.mxu0 %v1739
    %v1944 = vpop.f32.mrf.mxu0
    %v1945 = vadd.f32 %v1764, %v1944
    %v1946 = vpop.f32.mrf.mxu0
    %v1947 = vpop.f32.mrf.mxu0
    %v1948 = vadd.f32 %v1764, %v1947
    %v1949 = vpop.f32.mrf.mxu0
    %1950 = vmatprep.mubr.bf16.mxu0 0
    %1951 = vmatmul.mubr.bf16.gmra.mxu0 %v1740
    %v1952 = vpop.f32.mrf.mxu0
    %v1953 = vadd.f32 %v1764, %v1952
    %v1954 = vpop.f32.mrf.mxu0
    %v1955 = vpop.f32.mrf.mxu0
    %v1956 = vadd.f32 %v1764, %v1955
    %v1957 = vpop.f32.mrf.mxu0
    %1958 = vmatprep.mubr.bf16.mxu0 0
    %1959 = vmatmul.mubr.bf16.gmra.mxu0 %v1741
    %v1960 = vpop.f32.mrf.mxu0
    %v1961 = vadd.f32 %v1764, %v1960
    %v1962 = vpop.f32.mrf.mxu0
    %v1963 = vpop.f32.mrf.mxu0
    %v1964 = vadd.f32 %v1764, %v1963
    %v1965 = vpop.f32.mrf.mxu0
    %1966 = vmatprep.mubr.bf16.mxu0 0
    %1967 = vmatmul.mubr.bf16.gmra.mxu0 %v1742
    %v1968 = vpop.f32.mrf.mxu0
    %v1969 = vadd.f32 %v1764, %v1968
    %v1970 = vpop.f32.mrf.mxu0
    %v1971 = vpop.f32.mrf.mxu0
    %v1972 = vadd.f32 %v1764, %v1971
    %v1973 = vpop.f32.mrf.mxu0
    %1974 = vdwg.mxu0
    %v1975 = vmax.f32 %v1849, 0.0
    %v1976 = vmax.f32 %v1852, 0.0
    %v1977 = vmax.f32 %v1857, 0.0
    %v1978 = vmax.f32 %v1860, 0.0
    %v1979 = vmax.f32 %v1865, 0.0
    %v1980 = vmax.f32 %v1868, 0.0
    %v1981 = vmax.f32 %v1873, 0.0
    %v1982 = vmax.f32 %v1876, 0.0
    %v1983 = vmax.f32 %v1881, 0.0
    %v1984 = vmax.f32 %v1884, 0.0
    %v1985 = vmax.f32 %v1889, 0.0
    %v1986 = vmax.f32 %v1892, 0.0
    %v1987 = vmax.f32 %v1897, 0.0
    %v1988 = vmax.f32 %v1900, 0.0
    %v1989 = vmax.f32 %v1905, 0.0
    %v1990 = vmax.f32 %v1908, 0.0
    %v1991 = vmax.f32 %v1913, 0.0
    %v1992 = vmax.f32 %v1916, 0.0
    %v1993 = vmax.f32 %v1921, 0.0
    %v1994 = vmax.f32 %v1924, 0.0
    %v1995 = vmax.f32 %v1929, 0.0
    %v1996 = vmax.f32 %v1932, 0.0
    %v1997 = vmax.f32 %v1937, 0.0
    %v1998 = vmax.f32 %v1940, 0.0
    %v1999 = vmax.f32 %v1945, 0.0
    %v2000 = vmax.f32 %v1948, 0.0
    %v2001 = vmax.f32 %v1953, 0.0
    %v2002 = vmax.f32 %v1956, 0.0
    %v2003 = vmax.f32 %v1961, 0.0
    %v2004 = vmax.f32 %v1964, 0.0
    %v2005 = vmax.f32 %v1969, 0.0
    %v2006 = vmax.f32 %v1972, 0.0
    %v2007 = vld [vmem:[%s9] sm:$0x1]
    %v2008 = vpack.c.bf16 %v1976, %v1975
    %v2009 = vpack.c.bf16 %v1978, %v1977
    %v2010 = vpack.c.bf16 %v1980, %v1979
    %v2011 = vpack.c.bf16 %v1982, %v1981
    %v2012 = vpack.c.bf16 %v1984, %v1983
    %v2013 = vpack.c.bf16 %v1986, %v1985
    %v2014 = vpack.c.bf16 %v1988, %v1987
    %v2015 = vpack.c.bf16 %v1990, %v1989
    %v2016 = vpack.c.bf16 %v1992, %v1991
    %v2017 = vpack.c.bf16 %v1994, %v1993
    %v2018 = vpack.c.bf16 %v1996, %v1995
    %v2019 = vpack.c.bf16 %v1998, %v1997
    %v2020 = vpack.c.bf16 %v2000, %v1999
    %v2021 = vpack.c.bf16 %v2002, %v2001
    %v2022 = vpack.c.bf16 %v2004, %v2003
    %v2023 = vpack.c.bf16 %v2006, %v2005
    %v2024 = vld [vmem:[#allocation2] sm:$0x1]
    %2026 = vset.pattern.permute.xlu0 0
    %2027 = vperm.xlu0 %2026, %v2024
    %v2028 = vpop.permute.xlu0 %2027
    %v2030 = vlaneseq
    %v2031 = vshrl.u32 %v2030, 7
    %v2032 = vsub.s32 0, %v2031
    %v2033 = vrot.slane %v2028, %v2032
    %2034 = vmatprep.subr.bf16.mxu0 0
    %2035 = vmatpush1.bf16.xpose.msra.mxu0 %v2015
    %2036 = vmatprep.subr.bf16.mxu0 0
    %2037 = vmatpush1.bf16.xpose.msra.mxu0 %v2014
    %2038 = vmatprep.subr.bf16.mxu0 0
    %2039 = vmatpush1.bf16.xpose.msra.mxu0 %v2013
    %2040 = vmatprep.subr.bf16.mxu0 0
    %2041 = vmatpush1.bf16.xpose.msra.mxu0 %v2012
    %2042 = vmatprep.subr.bf16.mxu0 0
    %2043 = vmatpush1.bf16.xpose.msra.mxu0 %v2011
    %2044 = vmatprep.subr.bf16.mxu0 0
    %2045 = vmatpush1.bf16.xpose.msra.mxu0 %v2010
    %2046 = vmatprep.subr.bf16.mxu0 0
    %2047 = vmatpush1.bf16.xpose.msra.mxu0 %v2009
    %2048 = vmatprep.subr.bf16.mxu0 0
    %2049 = vmatpush1.bf16.xpose.msra.mxu0 %v2008
    %2050 = vmatprep.subr.bf16.mxu0 0
    %2051 = vmatpush2.bf16.xpose.msra.mxu0 %v2023
    %2052 = vmatprep.subr.bf16.mxu0 0
    %2053 = vmatpush2.bf16.xpose.msra.mxu0 %v2022
    %2054 = vmatprep.subr.bf16.mxu0 0
    %2055 = vmatpush2.bf16.xpose.msra.mxu0 %v2021
    %2056 = vmatprep.subr.bf16.mxu0 0
    %2057 = vmatpush2.bf16.xpose.msra.mxu0 %v2020
    %2058 = vmatprep.subr.bf16.mxu0 0
    %2059 = vmatpush2.bf16.xpose.msra.mxu0 %v2019
    %2060 = vmatprep.subr.bf16.mxu0 0
    %2061 = vmatpush2.bf16.xpose.msra.mxu0 %v2018
    %2062 = vmatprep.subr.bf16.mxu0 0
    %2063 = vmatpush2.bf16.xpose.msra.mxu0 %v2017
    %2064 = vmatprep.subr.bf16.mxu0 0
    %2065 = vmatpush2.bf16.xpose.msra.mxu0 %v2016
    %2066 = vmatprep.mubr.bf16.mxu0 0
    %2067 = vmatmul.mubr.bf16.gmra.mxu0 %v2007
    %v2068 = vpop.f32.mrf.mxu0
    %v2069 = vadd.f32 %v2033, %v2068
    %v2070 = vpop.f32.mrf.mxu0
    %v2071 = vadd.f32 %v2033, %v2070
    %v2072 = vpop.f32.mrf.mxu0
    %v2073 = vpop.f32.mrf.mxu0
    %2074 = vdwg.mxu0
    %v2077 = vcombine.low %v2069, %v2071
    %v2079 = vunpack.c.l.s4 1966171168
    %v2080 = vunpack.c.0.s8 %v2079
    %v2081 = vlaneseq
    %v2082 = vshrl.u32 %v2081, 7
    %v2083 = vsub.s32 %v2080, %v2082
    %v2084 = vrot.slane %v2077, %v2083
    %v2086 = vunpack.c.l.s4 1966171168
    %v2087 = vunpack.c.0.s8 %v2086
    %v2088 = vlaneseq
    %v2089 = vshrl.u32 %v2088, 7
    %v2090 = vsub.s32 %v2087, %v2089
    %v2091 = vrot.slane %v2084, %v2090
    %v2093 = vlaneseq
    %vm2094 = vcmp.ge.s32.totalorder %v2093, 0
    %vm2095 = vcmp.lt.s32.totalorder %v2093, 256
    %vm2096 = vmand %vm2094, %vm2095
    %2097 = vst.msk [vmem:[%s11] sm:$0x3] %vm2096, %v2091
    // Predicated region
    $region50: #{mlp_forward.1} parent=1 // pred_check
      _
    $region51: #{mlp_forward.1} parent=1 // pred_check_branch
      %2099 = sbr.rel (0) target = $region53
    $region52: #{mlp_forward.1} parent=1 // pred_region
      _
    $region53: #{mlp_forward.1} parent=1 // pred_fallthru
      _
    // Predicated region
    $region54: #{mlp_forward.1} parent=1 // pred_check
      _
    $region55: #{mlp_forward.1} parent=1 // pred_check_branch
      %2101 = sbr.rel (0) target = $region57
    $region56: #{mlp_forward.1} parent=1 // pred_region
      _
    $region57: #{mlp_forward.1} parent=1 // pred_fallthru
      _
    %2102 = vsyncpa [#allocation4], 1

</llo_original>
